<compile_context>
chip_gen: v6e
topology: v6e:2x2x1
jax: 0.10.0
libtpu: 0.0.40
codegen_flags: <defaults>
</compile_context>

<pallas_src>
import functools
import math

import jax
import jax.numpy as jnp
from jax.experimental import pallas as pl
from jax.experimental.pallas import tpu as pltpu

BN_EPS = 1e-5
LEAKY_SLOPE = 0.1
VMEM_BUDGET = 48 << 20          # conservative: leaves headroom inside v7x's 64 MiB


# ----------------------------------------------------------------------------
# tiling helpers
# ----------------------------------------------------------------------------
def _mxu_is_256_wide():
    """v6e / v7x have a 256-wide MXU; v4 / v5e are 128-wide."""
    try:
        kind = jax.devices()[0].device_kind.lower()
    except Exception:
        return False
    return ("v6" in kind) or ("v7" in kind)


def _pick_cout_tile(cout_p):
    """cout_p is already a multiple of 128."""
    prefs = (256, 128) if _mxu_is_256_wide() else (128,)
    for c in prefs:
        if cout_p % c == 0:
            return c
    return 128


def _pick_row_tile(oh, ow, tn):
    """Largest divisor of oh keeping the f32 accumulator <= ~64 KiB (16 vregs)."""
    t_m_budget = max(1, (64 * 1024) // (4 * tn))
    best = 1
    for t in range(1, oh + 1):
        if oh % t == 0 and t * ow <= t_m_budget:
            best = t
    return best


def _vmem_tile_bytes(shape, dtype):
    """Rough VMEM footprint of one tile, including (sublane, lane) padding."""
    itemsize = jnp.dtype(dtype).itemsize
    sub = 8 * (4 // itemsize)            # 8 for f32, 16 for bf16
    if len(shape) >= 2:
        *lead, s, l = shape
    else:
        lead, s, l = [], 1, (shape[0] if shape else 1)
    s_p = -(-s // sub) * sub
    l_p = -(-l // 128) * 128
    n = 1
    for d in lead:
        n *= d
    return n * s_p * l_p * itemsize


# ----------------------------------------------------------------------------
# Fused conv + folded-BN bias + LeakyReLU kernel (implicit im2col over taps)
# ----------------------------------------------------------------------------
def _cnn_block_kernel(x_ref, w_ref, b_ref, o_ref, *, k, stride, t_oh, ow):
    """x_ref: (hp, wp, cin)   bf16  -- padded NHWC sample, resident in VMEM
       w_ref: (k*k, cin, tn)  bf16  -- BN-scale-folded weights, tap-major
       b_ref: (1, tn)         f32   -- folded BN bias
       o_ref: (t_oh, ow, tn)  bf16  -- one output row-tile (NHWC)
    """
    cin = x_ref.shape[-1]
    tn = w_ref.shape[-1]
    t_m = t_oh * ow

    r = pl.program_id(2)                                  # output row tile
    row0 = pl.multiple_of(r * (t_oh * stride), t_oh * stride)

    acc = jnp.zeros((t_m, tn), jnp.float32)
    t = 0
    for ki in range(k):
        for kj in range(k):
            # Per-tap REF slice -> direct offset loads (no full-tile value).
            if stride == 1:
                a = x_ref[pl.ds(row0 + ki, t_oh), pl.ds(kj, ow), :]
            else:
                # TODO(synk): stride>1 strided-ref path is unexercised by the demo.
                a = x_ref[pl.ds(row0 + ki, t_oh, stride),
                          pl.ds(kj, ow, stride), :]
            # (t_oh, ow, cin) -> (t_m, cin) is layout-preserving when ow is a
            # multiple of the sublane tile (true here: ow = 16).
            acc = acc + jnp.dot(a.reshape(t_m, cin), w_ref[t],
                                preferred_element_type=jnp.float32)
            t += 1

    y = acc + b_ref[...]                                  # folded BN bias
    y = jnp.where(y >= 0, y, LEAKY_SLOPE * y)             # LeakyReLU(0.1)
    o_ref[...] = y.reshape(t_oh, ow, tn).astype(o_ref.dtype)


def cnn_block_forward(x_nhwc, conv_w, gamma, beta, running_mean, running_var,
                      *, stride, padding):
    """CNNBlock.forward (inference BN semantics).

    x_nhwc: (n, h, w, cin) activations (NHWC — keep NHWC across the network).
    conv_w: (cout, cin, kh, kw) PyTorch-layout conv weight.
    Returns NHWC bf16 of shape (n, oh, ow, cout).
    """
    n, h, w_dim, cin = x_nhwc.shape
    cout, cin2, kh, kw = conv_w.shape
    assert cin == cin2 and kh == kw, "square kernels only"
    k = kh
    oh = (h + 2 * padding - k) // stride + 1
    ow = (w_dim + 2 * padding - k) // stride + 1
    hp, wp = h + 2 * padding, w_dim + 2 * padding

    # ---- fold BN (running stats) into the conv weight and a per-channel bias
    scale = gamma / jnp.sqrt(running_var + BN_EPS)                    # (cout,)
    bias = (beta - running_mean * scale).astype(jnp.float32)          # (cout,)
    w_folded = conv_w.astype(jnp.float32) * scale[:, None, None, None]
    # (cout, cin, kh, kw) -> tap-major (kh*kw, cin, cout), ki-major / kj-minor.
    w_taps = jnp.transpose(w_folded, (2, 3, 1, 0)).reshape(k * k, cin, cout)

    # ---- pad cout to a multiple of 128 -> lane-dense unmasked output stores
    cout_p = -(-cout // 128) * 128
    if cout_p != cout:
        w_taps = jnp.pad(w_taps, ((0, 0), (0, 0), (0, cout_p - cout)))
        bias = jnp.pad(bias, (0, cout_p - cout))
    w_bf16 = w_taps.astype(jnp.bfloat16)
    bias2d = bias.reshape(1, cout_p)

    tn = _pick_cout_tile(cout_p)
    t_oh = _pick_row_tile(oh, ow, tn)

    # ---- bf16 cast + spatial zero pad (single fused HBM pass)
    # TODO(synk): padding could be folded into the kernel with masked boundary
    #             taps instead of a padded copy.
    xp = jnp.pad(x_nhwc.astype(jnp.bfloat16),
                 ((0, 0), (padding, padding), (padding, padding), (0, 0)))

    # ---- per-step VMEM footprint -> explicit (v7x-safe) vmem limit
    est = (2 * (_vmem_tile_bytes((hp, wp, cin), jnp.bfloat16)
                + _vmem_tile_bytes((k * k, cin, tn), jnp.bfloat16)
                + _vmem_tile_bytes((1, tn), jnp.float32)
                + _vmem_tile_bytes((t_oh, ow, tn), jnp.bfloat16))
           + t_oh * ow * tn * 4            # f32 accumulator
           + (2 << 20))                    # slack for temporaries
    vmem_limit = int(min(max(est, 16 << 20), VMEM_BUDGET))

    cost = pl.CostEstimate(
        flops=2 * n * oh * ow * cout_p * k * k * cin,
        transcendentals=0,
        bytes_accessed=(xp.size * 2 + w_bf16.size * 2 + bias2d.size * 4
                        + n * oh * ow * cout_p * 2))

    # grid = (sample, cout tile, output-row tile); row axis innermost so the
    # weight/bias blocks stay resident across it; the activation block only
    # depends on the sample index, so it is DMA'd once per sample.
    grid = (n, cout_p // tn, oh // t_oh)

    out = pl.pallas_call(
        functools.partial(_cnn_block_kernel, k=k, stride=stride,
                          t_oh=t_oh, ow=ow),
        out_shape=jax.ShapeDtypeStruct((n, oh, ow, cout_p), jnp.bfloat16),
        grid_spec=pltpu.PrefetchScalarGridSpec(
            num_scalar_prefetch=0,
            grid=grid,
            in_specs=[
                pl.BlockSpec((None, hp, wp, cin), lambda i, j, r: (i, 0, 0, 0)),
                pl.BlockSpec((k * k, cin, tn), lambda i, j, r: (0, 0, j)),
                pl.BlockSpec((1, tn), lambda i, j, r: (0, j)),
            ],
            out_specs=pl.BlockSpec((None, t_oh, ow, tn),
                                   lambda i, j, r: (i, r, 0, j)),
        ),
        compiler_params=pltpu.CompilerParams(
            dimension_semantics=("parallel", "parallel", "parallel"),
            vmem_limit_bytes=vmem_limit),
        cost_estimate=cost,
    )(xp, w_bf16, bias2d)

    if cout_p != cout:
        out = out[..., :cout]
    return out                                            # NHWC bf16


# ----------------------------------------------------------------------------
# pure-JAX reference (same bf16 operand / output rounding as the kernel)
# ----------------------------------------------------------------------------
def _reference(x_nchw, conv_w, gamma, beta, running_mean, running_var,
               *, stride, padding):
    scale = gamma / jnp.sqrt(running_var + BN_EPS)
    bias = beta - running_mean * scale
    wf = conv_w * scale[:, None, None, None]
    xb = x_nchw.astype(jnp.bfloat16).astype(jnp.float32)
    wb = wf.astype(jnp.bfloat16).astype(jnp.float32)
    y = jax.lax.conv_general_dilated(
        xb, wb, window_strides=(stride, stride),
        padding=[(padding, padding), (padding, padding)],
        dimension_numbers=("NCHW", "OIHW", "NCHW"),
        precision=jax.lax.Precision.HIGHEST)
    y = y + bias[None, :, None, None]
    y = jnp.where(y >= 0, y, LEAKY_SLOPE * y)
    return y.astype(jnp.bfloat16).astype(jnp.float32)     # match kernel output dtype


# ----------------------------------------------------------------------------
if __name__ == "__main__":
    N, CIN, H, W = 2, 32, 16, 16
    COUT, K, STRIDE, PAD = 128, 3, 1, 1      # lane-dense (128) output channels

    key = jax.random.PRNGKey(0)
    kx, kw_ = jax.random.split(key)
    x_nchw = jax.random.normal(kx, (N, CIN, H, W), jnp.float32)
    # Conv2d init from CNNBlock._initialize_weights: N(0, sqrt(2/(k*k*cout)))
    conv_w = jax.random.normal(kw_, (COUT, CIN, K, K), jnp.float32) * math.sqrt(
        2.0 / (K * K * COUT))
    # BatchNorm2d init: weight=1, bias=0, fresh running stats
    gamma = jnp.ones((COUT,), jnp.float32)
    beta = jnp.zeros((COUT,), jnp.float32)
    running_mean = jnp.zeros((COUT,), jnp.float32)
    running_var = jnp.ones((COUT,), jnp.float32)

    # One-time layout change; in a stacked network activations stay NHWC.
    x_nhwc = jnp.transpose(x_nchw, (0, 2, 3, 1))

    fwd = jax.jit(functools.partial(cnn_block_forward, stride=STRIDE, padding=PAD))
    y_nhwc = jax.block_until_ready(
        fwd(x_nhwc, conv_w, gamma, beta, running_mean, running_var))

    assert y_nhwc.shape == (N, H, W, COUT), y_nhwc.shape
    assert y_nhwc.dtype == jnp.bfloat16, y_nhwc.dtype

    # NCHW transpose only in the test harness (comparison vs PyTorch layout).
    y_nchw = jnp.transpose(y_nhwc.astype(jnp.float32), (0, 3, 1, 2))
    y_ref = _reference(x_nchw, conv_w, gamma, beta, running_mean, running_var,
                       stride=STRIDE, padding=PAD)
    assert bool(jnp.all(jnp.isfinite(y_nchw)))
    max_err = float(jnp.max(jnp.abs(y_nchw - y_ref)))
    assert bool(jnp.allclose(y_nchw, y_ref, atol=2e-2, rtol=2e-2)), max_err
    print("KERNEL_OK")
</pallas_src>

<mosaic_0001>
module attributes {stable_mosaic.version = 11 : i64} {
  func.func @_cnn_block_kernel(%arg0: i32, %arg1: i32, %arg2: i32, %arg3: memref<1x18x18x32xbf16, #tpu.memory_space<vmem>>, %arg4: memref<9x32x128xbf16, #tpu.memory_space<vmem>>, %arg5: memref<1x128xf32, #tpu.memory_space<vmem>>, %arg6: memref<1x8x16x128xbf16, #tpu.memory_space<vmem>>) attributes {dimension_semantics = [#tpu.dimension_semantics<parallel>, #tpu.dimension_semantics<parallel>, #tpu.dimension_semantics<parallel>], iteration_bounds = array<i64: 2, 1, 2>, scalar_prefetch = 0 : i64, scratch_operands = 0 : i64, tpu.core_type = #tpu.core_type<tc>, window_params = [{transform_indices = @transform_0, window_bounds = array<i64: 1, 18, 18, 32>}, {transform_indices = @transform_1, window_bounds = array<i64: 9, 32, 128>}, {transform_indices = @transform_2, window_bounds = array<i64: 1, 128>}, {transform_indices = @transform_3, window_bounds = array<i64: 1, 8, 16, 128>}]} {
    %c8_i32 = arith.constant 8 : i32
    %0 = arith.muli %arg2, %c8_i32 : i32
    %1 = tpu.assume_multiple %0, 8 : i32
    %cst = arith.constant 0.000000e+00 : f32
    %2 = vector.broadcast %cst : f32 to vector<128x128xf32>
    %c0_i32 = arith.constant 0 : i32
    %3 = arith.addi %1, %c0_i32 : i32
    %c0 = arith.constant 0 : index
    %4 = arith.index_cast %3 : i32 to index
    %c0_0 = arith.constant 0 : index
    %c0_1 = arith.constant 0 : index
    %5 = vector.load %arg3[%c0, %4, %c0_0, %c0_1] : memref<1x18x18x32xbf16, #tpu.memory_space<vmem>>, vector<1x8x16x32xbf16>
    %6 = vector.shape_cast %5 : vector<1x8x16x32xbf16> to vector<8x16x32xbf16>
    %7 = vector.shape_cast %6 : vector<8x16x32xbf16> to vector<128x32xbf16>
    %c0_2 = arith.constant 0 : index
    %c0_3 = arith.constant 0 : index
    %c0_4 = arith.constant 0 : index
    %8 = vector.load %arg4[%c0_2, %c0_3, %c0_4] : memref<9x32x128xbf16, #tpu.memory_space<vmem>>, vector<1x32x128xbf16>
    %9 = vector.shape_cast %8 : vector<1x32x128xbf16> to vector<32x128xbf16>
    %cst_5 = arith.constant dense<0.000000e+00> : vector<128x128xf32>
    %10 = tpu.matmul %7, %9, %cst_5 {dimension_numbers = #tpu.dot_dimension_numbers<[1], [0], [0], [1], [0, 0, 1, 1], [], []>} : vector<128x32xbf16>, vector<32x128xbf16>, vector<128x128xf32> -> vector<128x128xf32>
    %11 = arith.addf %2, %10 : vector<128x128xf32>
    %c0_i32_6 = arith.constant 0 : i32
    %12 = arith.addi %1, %c0_i32_6 : i32
    %c0_7 = arith.constant 0 : index
    %13 = arith.index_cast %12 : i32 to index
    %c1 = arith.constant 1 : index
    %c0_8 = arith.constant 0 : index
    %14 = vector.load %arg3[%c0_7, %13, %c1, %c0_8] : memref<1x18x18x32xbf16, #tpu.memory_space<vmem>>, vector<1x8x16x32xbf16>
    %15 = vector.shape_cast %14 : vector<1x8x16x32xbf16> to vector<8x16x32xbf16>
    %16 = vector.shape_cast %15 : vector<8x16x32xbf16> to vector<128x32xbf16>
    %c1_9 = arith.constant 1 : index
    %c0_10 = arith.constant 0 : index
    %c0_11 = arith.constant 0 : index
    %17 = vector.load %arg4[%c1_9, %c0_10, %c0_11] : memref<9x32x128xbf16, #tpu.memory_space<vmem>>, vector<1x32x128xbf16>
    %18 = vector.shape_cast %17 : vector<1x32x128xbf16> to vector<32x128xbf16>
    %cst_12 = arith.constant dense<0.000000e+00> : vector<128x128xf32>
    %19 = tpu.matmul %16, %18, %cst_12 {dimension_numbers = #tpu.dot_dimension_numbers<[1], [0], [0], [1], [0, 0, 1, 1], [], []>} : vector<128x32xbf16>, vector<32x128xbf16>, vector<128x128xf32> -> vector<128x128xf32>
    %20 = arith.addf %11, %19 : vector<128x128xf32>
    %c0_i32_13 = arith.constant 0 : i32
    %21 = arith.addi %1, %c0_i32_13 : i32
    %c0_14 = arith.constant 0 : index
    %22 = arith.index_cast %21 : i32 to index
    %c2 = arith.constant 2 : index
    %c0_15 = arith.constant 0 : index
    %23 = vector.load %arg3[%c0_14, %22, %c2, %c0_15] : memref<1x18x18x32xbf16, #tpu.memory_space<vmem>>, vector<1x8x16x32xbf16>
    %24 = vector.shape_cast %23 : vector<1x8x16x32xbf16> to vector<8x16x32xbf16>
    %25 = vector.shape_cast %24 : vector<8x16x32xbf16> to vector<128x32xbf16>
    %c2_16 = arith.constant 2 : index
    %c0_17 = arith.constant 0 : index
    %c0_18 = arith.constant 0 : index
    %26 = vector.load %arg4[%c2_16, %c0_17, %c0_18] : memref<9x32x128xbf16, #tpu.memory_space<vmem>>, vector<1x32x128xbf16>
    %27 = vector.shape_cast %26 : vector<1x32x128xbf16> to vector<32x128xbf16>
    %cst_19 = arith.constant dense<0.000000e+00> : vector<128x128xf32>
    %28 = tpu.matmul %25, %27, %cst_19 {dimension_numbers = #tpu.dot_dimension_numbers<[1], [0], [0], [1], [0, 0, 1, 1], [], []>} : vector<128x32xbf16>, vector<32x128xbf16>, vector<128x128xf32> -> vector<128x128xf32>
    %29 = arith.addf %20, %28 : vector<128x128xf32>
    %c1_i32 = arith.constant 1 : i32
    %30 = arith.addi %1, %c1_i32 : i32
    %c0_20 = arith.constant 0 : index
    %31 = arith.index_cast %30 : i32 to index
    %c0_21 = arith.constant 0 : index
    %c0_22 = arith.constant 0 : index
    %32 = vector.load %arg3[%c0_20, %31, %c0_21, %c0_22] : memref<1x18x18x32xbf16, #tpu.memory_space<vmem>>, vector<1x8x16x32xbf16>
    %33 = vector.shape_cast %32 : vector<1x8x16x32xbf16> to vector<8x16x32xbf16>
    %34 = vector.shape_cast %33 : vector<8x16x32xbf16> to vector<128x32xbf16>
    %c3 = arith.constant 3 : index
    %c0_23 = arith.constant 0 : index
    %c0_24 = arith.constant 0 : index
    %35 = vector.load %arg4[%c3, %c0_23, %c0_24] : memref<9x32x128xbf16, #tpu.memory_space<vmem>>, vector<1x32x128xbf16>
    %36 = vector.shape_cast %35 : vector<1x32x128xbf16> to vector<32x128xbf16>
    %cst_25 = arith.constant dense<0.000000e+00> : vector<128x128xf32>
    %37 = tpu.matmul %34, %36, %cst_25 {dimension_numbers = #tpu.dot_dimension_numbers<[1], [0], [0], [1], [0, 0, 1, 1], [], []>} : vector<128x32xbf16>, vector<32x128xbf16>, vector<128x128xf32> -> vector<128x128xf32>
    %38 = arith.addf %29, %37 : vector<128x128xf32>
    %c1_i32_26 = arith.constant 1 : i32
    %39 = arith.addi %1, %c1_i32_26 : i32
    %c0_27 = arith.constant 0 : index
    %40 = arith.index_cast %39 : i32 to index
    %c1_28 = arith.constant 1 : index
    %c0_29 = arith.constant 0 : index
    %41 = vector.load %arg3[%c0_27, %40, %c1_28, %c0_29] : memref<1x18x18x32xbf16, #tpu.memory_space<vmem>>, vector<1x8x16x32xbf16>
    %42 = vector.shape_cast %41 : vector<1x8x16x32xbf16> to vector<8x16x32xbf16>
    %43 = vector.shape_cast %42 : vector<8x16x32xbf16> to vector<128x32xbf16>
    %c4 = arith.constant 4 : index
    %c0_30 = arith.constant 0 : index
    %c0_31 = arith.constant 0 : index
    %44 = vector.load %arg4[%c4, %c0_30, %c0_31] : memref<9x32x128xbf16, #tpu.memory_space<vmem>>, vector<1x32x128xbf16>
    %45 = vector.shape_cast %44 : vector<1x32x128xbf16> to vector<32x128xbf16>
    %cst_32 = arith.constant dense<0.000000e+00> : vector<128x128xf32>
    %46 = tpu.matmul %43, %45, %cst_32 {dimension_numbers = #tpu.dot_dimension_numbers<[1], [0], [0], [1], [0, 0, 1, 1], [], []>} : vector<128x32xbf16>, vector<32x128xbf16>, vector<128x128xf32> -> vector<128x128xf32>
    %47 = arith.addf %38, %46 : vector<128x128xf32>
    %c1_i32_33 = arith.constant 1 : i32
    %48 = arith.addi %1, %c1_i32_33 : i32
    %c0_34 = arith.constant 0 : index
    %49 = arith.index_cast %48 : i32 to index
    %c2_35 = arith.constant 2 : index
    %c0_36 = arith.constant 0 : index
    %50 = vector.load %arg3[%c0_34, %49, %c2_35, %c0_36] : memref<1x18x18x32xbf16, #tpu.memory_space<vmem>>, vector<1x8x16x32xbf16>
    %51 = vector.shape_cast %50 : vector<1x8x16x32xbf16> to vector<8x16x32xbf16>
    %52 = vector.shape_cast %51 : vector<8x16x32xbf16> to vector<128x32xbf16>
    %c5 = arith.constant 5 : index
    %c0_37 = arith.constant 0 : index
    %c0_38 = arith.constant 0 : index
    %53 = vector.load %arg4[%c5, %c0_37, %c0_38] : memref<9x32x128xbf16, #tpu.memory_space<vmem>>, vector<1x32x128xbf16>
    %54 = vector.shape_cast %53 : vector<1x32x128xbf16> to vector<32x128xbf16>
    %cst_39 = arith.constant dense<0.000000e+00> : vector<128x128xf32>
    %55 = tpu.matmul %52, %54, %cst_39 {dimension_numbers = #tpu.dot_dimension_numbers<[1], [0], [0], [1], [0, 0, 1, 1], [], []>} : vector<128x32xbf16>, vector<32x128xbf16>, vector<128x128xf32> -> vector<128x128xf32>
    %56 = arith.addf %47, %55 : vector<128x128xf32>
    %c2_i32 = arith.constant 2 : i32
    %57 = arith.addi %1, %c2_i32 : i32
    %c0_40 = arith.constant 0 : index
    %58 = arith.index_cast %57 : i32 to index
    %c0_41 = arith.constant 0 : index
    %c0_42 = arith.constant 0 : index
    %59 = vector.load %arg3[%c0_40, %58, %c0_41, %c0_42] : memref<1x18x18x32xbf16, #tpu.memory_space<vmem>>, vector<1x8x16x32xbf16>
    %60 = vector.shape_cast %59 : vector<1x8x16x32xbf16> to vector<8x16x32xbf16>
    %61 = vector.shape_cast %60 : vector<8x16x32xbf16> to vector<128x32xbf16>
    %c6 = arith.constant 6 : index
    %c0_43 = arith.constant 0 : index
    %c0_44 = arith.constant 0 : index
    %62 = vector.load %arg4[%c6, %c0_43, %c0_44] : memref<9x32x128xbf16, #tpu.memory_space<vmem>>, vector<1x32x128xbf16>
    %63 = vector.shape_cast %62 : vector<1x32x128xbf16> to vector<32x128xbf16>
    %cst_45 = arith.constant dense<0.000000e+00> : vector<128x128xf32>
    %64 = tpu.matmul %61, %63, %cst_45 {dimension_numbers = #tpu.dot_dimension_numbers<[1], [0], [0], [1], [0, 0, 1, 1], [], []>} : vector<128x32xbf16>, vector<32x128xbf16>, vector<128x128xf32> -> vector<128x128xf32>
    %65 = arith.addf %56, %64 : vector<128x128xf32>
    %c2_i32_46 = arith.constant 2 : i32
    %66 = arith.addi %1, %c2_i32_46 : i32
    %c0_47 = arith.constant 0 : index
    %67 = arith.index_cast %66 : i32 to index
    %c1_48 = arith.constant 1 : index
    %c0_49 = arith.constant 0 : index
    %68 = vector.load %arg3[%c0_47, %67, %c1_48, %c0_49] : memref<1x18x18x32xbf16, #tpu.memory_space<vmem>>, vector<1x8x16x32xbf16>
    %69 = vector.shape_cast %68 : vector<1x8x16x32xbf16> to vector<8x16x32xbf16>
    %70 = vector.shape_cast %69 : vector<8x16x32xbf16> to vector<128x32xbf16>
    %c7 = arith.constant 7 : index
    %c0_50 = arith.constant 0 : index
    %c0_51 = arith.constant 0 : index
    %71 = vector.load %arg4[%c7, %c0_50, %c0_51] : memref<9x32x128xbf16, #tpu.memory_space<vmem>>, vector<1x32x128xbf16>
    %72 = vector.shape_cast %71 : vector<1x32x128xbf16> to vector<32x128xbf16>
    %cst_52 = arith.constant dense<0.000000e+00> : vector<128x128xf32>
    %73 = tpu.matmul %70, %72, %cst_52 {dimension_numbers = #tpu.dot_dimension_numbers<[1], [0], [0], [1], [0, 0, 1, 1], [], []>} : vector<128x32xbf16>, vector<32x128xbf16>, vector<128x128xf32> -> vector<128x128xf32>
    %74 = arith.addf %65, %73 : vector<128x128xf32>
    %c2_i32_53 = arith.constant 2 : i32
    %75 = arith.addi %1, %c2_i32_53 : i32
    %c0_54 = arith.constant 0 : index
    %76 = arith.index_cast %75 : i32 to index
    %c2_55 = arith.constant 2 : index
    %c0_56 = arith.constant 0 : index
    %77 = vector.load %arg3[%c0_54, %76, %c2_55, %c0_56] : memref<1x18x18x32xbf16, #tpu.memory_space<vmem>>, vector<1x8x16x32xbf16>
    %78 = vector.shape_cast %77 : vector<1x8x16x32xbf16> to vector<8x16x32xbf16>
    %79 = vector.shape_cast %78 : vector<8x16x32xbf16> to vector<128x32xbf16>
    %c8 = arith.constant 8 : index
    %c0_57 = arith.constant 0 : index
    %c0_58 = arith.constant 0 : index
    %80 = vector.load %arg4[%c8, %c0_57, %c0_58] : memref<9x32x128xbf16, #tpu.memory_space<vmem>>, vector<1x32x128xbf16>
    %81 = vector.shape_cast %80 : vector<1x32x128xbf16> to vector<32x128xbf16>
    %cst_59 = arith.constant dense<0.000000e+00> : vector<128x128xf32>
    %82 = tpu.matmul %79, %81, %cst_59 {dimension_numbers = #tpu.dot_dimension_numbers<[1], [0], [0], [1], [0, 0, 1, 1], [], []>} : vector<128x32xbf16>, vector<32x128xbf16>, vector<128x128xf32> -> vector<128x128xf32>
    %83 = arith.addf %74, %82 : vector<128x128xf32>
    %c0_60 = arith.constant 0 : index
    %c0_61 = arith.constant 0 : index
    %84 = vector.load %arg5[%c0_60, %c0_61] : memref<1x128xf32, #tpu.memory_space<vmem>>, vector<1x128xf32>
    %85 = vector.broadcast %84 : vector<1x128xf32> to vector<128x128xf32>
    %86 = arith.addf %83, %85 : vector<128x128xf32>
    %cst_62 = arith.constant 0.000000e+00 : f32
    %87 = vector.broadcast %cst_62 : f32 to vector<128x128xf32>
    %88 = arith.cmpf oge, %86, %87 : vector<128x128xf32>
    %cst_63 = arith.constant 1.000000e-01 : f32
    %89 = vector.broadcast %cst_63 : f32 to vector<128x128xf32>
    %90 = arith.mulf %89, %86 : vector<128x128xf32>
    %91 = arith.select %88, %86, %90 : vector<128x128xi1>, vector<128x128xf32>
    %92 = vector.shape_cast %91 : vector<128x128xf32> to vector<8x16x128xf32>
    %93 = arith.truncf %92 : vector<8x16x128xf32> to vector<8x16x128xbf16>
    %c0_64 = arith.constant 0 : index
    %c0_65 = arith.constant 0 : index
    %c0_66 = arith.constant 0 : index
    %c0_67 = arith.constant 0 : index
    %94 = vector.load %arg6[%c0_64, %c0_65, %c0_66, %c0_67] : memref<1x8x16x128xbf16, #tpu.memory_space<vmem>>, vector<1x8x16x128xbf16>
    %95 = vector.shape_cast %94 : vector<1x8x16x128xbf16> to vector<8x16x128xbf16>
    %96 = vector.shape_cast %93 : vector<8x16x128xbf16> to vector<1x8x16x128xbf16>
    tpu.vector_store %arg6[%c0_64, %c0_65, %c0_66, %c0_67], %96 {strides = array<i32>} : memref<1x8x16x128xbf16, #tpu.memory_space<vmem>>, vector<1x8x16x128xbf16>,
    return
  }
  func.func @transform_0(%arg0: i32, %arg1: i32, %arg2: i32) -> (i32, i32, i32, i32) {
    %c0_i32 = arith.constant 0 : i32
    %c0_i32_0 = arith.constant 0 : i32
    %c0_i32_1 = arith.constant 0 : i32
    %c0_i32_2 = arith.constant 0 : i32
    return %arg0, %c0_i32, %c0_i32_0, %c0_i32_1 : i32, i32, i32, i32
  }
  func.func @transform_1(%arg0: i32, %arg1: i32, %arg2: i32) -> (i32, i32, i32) {
    %c0_i32 = arith.constant 0 : i32
    %c0_i32_0 = arith.constant 0 : i32
    %c0_i32_1 = arith.constant 0 : i32
    return %c0_i32, %c0_i32_0, %arg1 : i32, i32, i32
  }
  func.func @transform_2(%arg0: i32, %arg1: i32, %arg2: i32) -> (i32, i32) {
    %c0_i32 = arith.constant 0 : i32
    %c0_i32_0 = arith.constant 0 : i32
    return %c0_i32, %arg1 : i32, i32
  }
  func.func @transform_3(%arg0: i32, %arg1: i32, %arg2: i32) -> (i32, i32, i32, i32) {
    %c0_i32 = arith.constant 0 : i32
    %c0_i32_0 = arith.constant 0 : i32
    return %arg0, %arg2, %c0_i32, %arg1 : i32, i32, i32, i32
  }
}

</mosaic_0001>

<llo_original>
// kernel: cnn_block_forward.1
$region0: #{cnn_block_forward.1}
  #allocation0 [shape = 'u32[]', space=smem, size = 0x4, offset = 0x4, fixed_abs, tag = 'smem constant byte address 0x4 - core index']
  #allocation1 [shape = 'u32[144,128]{1,0:T(1,128)}', space=vmem, size = 0x12000, scoped, tag = 'internal scratch']
  %s0 = inlined_call_operand.vmem [shape: bf16[2,18,18,32], index: 0, kind: input, shape index: {}]
  %s1 = inlined_call_operand.vmem [shape: bf16[9,32,128], index: 1, kind: input, shape index: {}]
  %s2 = inlined_call_operand.vmem [shape: f32[1,128], index: 2, kind: input, shape index: {}]
  %s3 = inlined_call_operand.hbm [shape: bf16[2,16,16,128], index: 3, kind: output, shape index: {}]
  %s4 = sld [smem:[#allocation0]]
  $region45: #{cnn_block_forward.1} parent=0
    _
  %s6 = ssub.s32 1, %s4
  %s7 = scalar_select 0, %s6, %s4
  $region1: #{cnn_block_forward.1} parent=0
    #allocation2 [shape = 'u8[65536]{0}', space=vmem, size = 0x10000, scoped, tag = 'output window, operand 0']
    #allocation3 [shape = 's32[2]{0}', space=sflag, size = 0x8, scoped, tag = 'scoped memory for cnn_block_forward.1']
    %8 = vsyncpa [#allocation3], 0
    %s9 = scalar_lea.sflag [#allocation3], 1
    %10 = vsyncpa %s9, 0
    loop: start=0, step=1, limit=6
    $region2: #{cnn_block_forward.1} parent=1 // loop_pre_header
      _
    $region3: #{cnn_block_forward.1} parent=1 // loop_header
      %s12 = sphi 0, %s16
      %p13 = scmp.ge.s32.totalorder %s12, 6
      %s19 = sphi 0, %s38
      %s20 = sphi 0, %s34
      %s21 = sphi 0, %s30
      %s22 = sphi 0, %s19
      %s23 = sphi 0, %s20
      %s24 = sphi 0, %s21
      %s25 = sphi 0, %s22
      %s26 = sphi 0, %s23
      %s27 = sphi 0, %s24
      %s41 = sphi 0, %s43
      %s44 = sphi 0, %s41
      %s45 = sphi 0, %s44
      %s61 = sphi 0, %s45
      %s67 = sphi 0, %s69
      %s70 = sphi 0, %s67
      %s71 = sphi 0, %s70
      %s87 = sphi 0, %s71
      %s93 = sphi 0, %s95
      %s96 = sphi 0, %s93
      %s97 = sphi 0, %s96
      %s113 = sphi 0, %s97
      %s123 = sphi 0, %s125
      %s126 = sphi 0, %s123
      %s127 = sphi 0, %s126
      %s143 = sphi 0, %s127
    $region4: #{cnn_block_forward.1} parent=1 // loop_header_branch
      %15 = sbr.rel (%p13) target = $region8
    $region5: #{cnn_block_forward.1} parent=1 // loop_body
      %s17 = ssub.s32 %s12, 1
      %s18 = ssub.s32 %s12, 2
      %s28 = sadd.s32 1, %s21
      %p29 = scmp.ge.s32.totalorder %s28, 2
      %s30 = scalar_select %p29, 0, %s28
      %s31 = sadd.s32 1, %s20
      %s32 = scalar_select %p29, %s31, %s20
      %p33 = scmp.ge.s32.totalorder %s32, 1
      %s34 = scalar_select %p33, 0, %s32
      %s35 = sadd.s32 1, %s19
      %s36 = scalar_select %p33, %s35, %s19
      %p37 = scmp.ge.s32.totalorder %s36, 2
      %s38 = scalar_select %p37, 0, %s36
      %s39 = ssub.s32 %s19, %s38
      %p40 = scmp.eq.s32.totalorder %s39, 0
      %s42 = sadd.s32 %s41, 1
      %s43 = scalar_select %p40, %s41, %s42
      %p46 = pneg %p40
      %p47 = scmp.eq.s32.totalorder %s12, 3
      %p48 = por %p46, %p47
      %p49 = scmp.ne.s32.totalorder %s41, %s44
      %p50 = scmp.eq.s32.totalorder %s12, 0
      %p51 = por %p49, %p50
      %p52 = scmp.ne.s32.totalorder %s41, %s44
      %p53 = scmp.eq.s32.totalorder %s17, 3
      %p54 = por %p52, %p53
      %p55 = scmp.ne.s32.totalorder %s44, %s45
      %p56 = scmp.eq.s32.totalorder %s17, 0
      %p57 = por %p55, %p56
      %p58 = scmp.ne.s32.totalorder %s44, %s45
      %p59 = scmp.eq.s32.totalorder %s18, 3
      %p60 = por %p58, %p59
      %p62 = scmp.ne.s32.totalorder %s45, %s61
      %p63 = scmp.eq.s32.totalorder %s18, 0
      %p64 = por %p62, %p63
      %s65 = ssub.s32 %s20, %s34
      %p66 = scmp.eq.s32.totalorder %s65, 0
      %s68 = sadd.s32 %s67, 1
      %s69 = scalar_select %p66, %s67, %s68
      %p72 = pneg %p66
      %p73 = scmp.eq.s32.totalorder %s12, 3
      %p74 = por %p72, %p73
      %p75 = scmp.ne.s32.totalorder %s67, %s70
      %p76 = scmp.eq.s32.totalorder %s12, 0
      %p77 = por %p75, %p76
      %p78 = scmp.ne.s32.totalorder %s67, %s70
      %p79 = scmp.eq.s32.totalorder %s17, 3
      %p80 = por %p78, %p79
      %p81 = scmp.ne.s32.totalorder %s70, %s71
      %p82 = scmp.eq.s32.totalorder %s17, 0
      %p83 = por %p81, %p82
      %p84 = scmp.ne.s32.totalorder %s70, %s71
      %p85 = scmp.eq.s32.totalorder %s18, 3
      %p86 = por %p84, %p85
      %p88 = scmp.ne.s32.totalorder %s71, %s87
      %p89 = scmp.eq.s32.totalorder %s18, 0
      %p90 = por %p88, %p89
      %s91 = ssub.s32 %s20, %s34
      %p92 = scmp.eq.s32.totalorder %s91, 0
      %s94 = sadd.s32 %s93, 1
      %s95 = scalar_select %p92, %s93, %s94
      %p98 = pneg %p92
      %p99 = scmp.eq.s32.totalorder %s12, 3
      %p100 = por %p98, %p99
      %p101 = scmp.ne.s32.totalorder %s93, %s96
      %p102 = scmp.eq.s32.totalorder %s12, 0
      %p103 = por %p101, %p102
      %p104 = scmp.ne.s32.totalorder %s93, %s96
      %p105 = scmp.eq.s32.totalorder %s17, 3
      %p106 = por %p104, %p105
      %p107 = scmp.ne.s32.totalorder %s96, %s97
      %p108 = scmp.eq.s32.totalorder %s17, 0
      %p109 = por %p107, %p108
      %p110 = scmp.ne.s32.totalorder %s96, %s97
      %p111 = scmp.eq.s32.totalorder %s18, 3
      %p112 = por %p110, %p111
      %p114 = scmp.ne.s32.totalorder %s97, %s113
      %p115 = scmp.eq.s32.totalorder %s18, 0
      %p116 = por %p114, %p115
      %s117 = ssub.s32 %s19, %s38
      %s118 = ssub.s32 %s21, %s30
      %s119 = sor.u32 %s117, %s118
      %s120 = ssub.s32 %s20, %s34
      %s121 = sor.u32 %s119, %s120
      %p122 = scmp.eq.s32.totalorder %s121, 0
      %s124 = sadd.s32 %s123, 1
      %s125 = scalar_select %p122, %s123, %s124
      %p128 = pneg %p122
      %p129 = scmp.eq.s32.totalorder %s12, 3
      %p130 = por %p128, %p129
      %p131 = scmp.ne.s32.totalorder %s123, %s126
      %p132 = scmp.eq.s32.totalorder %s12, 0
      %p133 = por %p131, %p132
      %p134 = scmp.ne.s32.totalorder %s123, %s126
      %p135 = scmp.eq.s32.totalorder %s17, 3
      %p136 = por %p134, %p135
      %p137 = scmp.ne.s32.totalorder %s126, %s127
      %p138 = scmp.eq.s32.totalorder %s17, 0
      %p139 = por %p137, %p138
      %p140 = scmp.ne.s32.totalorder %s126, %s127
      %p141 = scmp.eq.s32.totalorder %s18, 3
      %p142 = por %p140, %p141
      %p144 = scmp.ne.s32.totalorder %s127, %s143
      %p145 = scmp.eq.s32.totalorder %s18, 0
      %p146 = por %p144, %p145
      %p147 = scmp.le.s32.totalorder 1, %s12
      %p148 = scmp.lt.s32.totalorder %s12, 5
      %p149 = pnand %p147, %p148
      %p150 = pneg %p149
      // Predicated region
      $region9: #{cnn_block_forward.1} parent=5 // pred_check
        _
      $region10: #{cnn_block_forward.1} parent=5 // pred_check_branch
        %152 = sbr.rel (%p149) target = $region12
      $region11: #{cnn_block_forward.1} parent=5 // pred_region
        %s153 = ssub.s32 %s12, 1
        // Predicated region
        $region13: #{cnn_block_forward.1} parent=11 // pred_check
          %p154 = pneg %p83
        $region14: #{cnn_block_forward.1} parent=11 // pred_check_branch
          %156 = sbr.rel (%p154) target = $region16
        $region15: #{cnn_block_forward.1} parent=11 // pred_region
          %p157 = scmp.lt.s32.totalorder %s23, 0
          %s158 = scalar_select %p157, %s23, 0
          %s159 = smul.addr %s158, 4
          %s160 = scalar_lea.vmem %s1, %s159
        $region16: #{cnn_block_forward.1} parent=11 // pred_fallthru
          _
        // Predicated region
        $region17: #{cnn_block_forward.1} parent=11 // pred_check
          %p161 = pneg %p109
        $region18: #{cnn_block_forward.1} parent=11 // pred_check_branch
          %163 = sbr.rel (%p161) target = $region20
        $region19: #{cnn_block_forward.1} parent=11 // pred_region
          %p164 = scmp.lt.s32.totalorder %s23, 0
          %s165 = scalar_select %p164, %s23, 0
          %s166 = scalar_lea.vmem %s2, %s165
        $region20: #{cnn_block_forward.1} parent=11 // pred_fallthru
          _
      $region12: #{cnn_block_forward.1} parent=5 // pred_fallthru
        _
      %p167 = scmp.lt.s32.totalorder %s12, 4
      // Predicated region
      $region21: #{cnn_block_forward.1} parent=5 // pred_check
        %p168 = pneg %p167
      $region22: #{cnn_block_forward.1} parent=5 // pred_check_branch
        %170 = sbr.rel (%p168) target = $region24
      $region23: #{cnn_block_forward.1} parent=5 // pred_region
        // Predicated region
        $region25: #{cnn_block_forward.1} parent=23 // pred_check
          %p171 = pneg %p51
        $region26: #{cnn_block_forward.1} parent=23 // pred_check_branch
          %173 = sbr.rel (%p171) target = $region28
        $region27: #{cnn_block_forward.1} parent=23 // pred_region
          %p174 = scmp.lt.s32.totalorder %s19, 1
          %s175 = scalar_select %p174, %s19, 1
          %s176 = smul.addr %s175, 54
          %s177 = smul.addr %s176, 4
          %s178 = scalar_lea.vmem %s0, %s177
        $region28: #{cnn_block_forward.1} parent=23 // pred_fallthru
          _
      $region24: #{cnn_block_forward.1} parent=5 // pred_fallthru
        _
      %p179 = scmp.le.s32.totalorder 1, %s12
      %p180 = scmp.lt.s32.totalorder %s12, 5
      %p181 = pnand %p179, %p180
      %p182 = pneg %p181
      // Predicated region
      $region29: #{cnn_block_forward.1} parent=5 // pred_check
        _
      $region30: #{cnn_block_forward.1} parent=5 // pred_check_branch
        %184 = sbr.rel (%p181) target = $region32
      $region31: #{cnn_block_forward.1} parent=5 // pred_region
        %s185 = ssub.s32 %s12, 1
        %p186 = scmp.lt.s32.totalorder %s22, 1
        %s187 = scalar_select %p186, %s22, 1
        %s188 = smul.addr %s187, 54
        %s189 = smul.addr %s188, 4
        %s190 = scalar_lea.vmem %s0, %s189
        %p191 = pneg %p57
        %p192 = pneg %p54
        %p193 = scmp.lt.s32.totalorder %s23, 0
        %s194 = scalar_select %p193, %s23, 0
        %s195 = smul.addr %s194, 4
        %s196 = scalar_lea.vmem %s1, %s195
        %p197 = pneg %p83
        %p198 = pneg %p80
        %p199 = scmp.lt.s32.totalorder %s23, 0
        %s200 = scalar_select %p199, %s23, 0
        %s201 = scalar_lea.vmem %s2, %s200
        %p202 = pneg %p109
        %p203 = pneg %p106
        %p204 = pneg %p139
        %p205 = pneg %p136
        %s206 = sand.u32 %s126, 1
        %s207 = scalar_lea.sflag [#allocation3], %s206
        %s208 = sand.u32 %s126, 1
        %s209 = smul.addr %s208, 64
        %s210 = scalar_lea.vmem [#allocation2], %s209
        %p211 = scmp.lt.s32.totalorder %s22, 1
        %s212 = scalar_select %p211, %s22, 1
        %s213 = smul.addr %s212, 54
        %s214 = smul.addr %s213, 4
        %s215 = scalar_lea.vmem %s0, %s214
        %p216 = scmp.lt.s32.totalorder %s23, 0
        %s217 = scalar_select %p216, %s23, 0
        %s218 = smul.addr %s217, 4
        %s219 = scalar_lea.vmem %s1, %s218
        %p220 = scmp.lt.s32.totalorder %s23, 0
        %s221 = scalar_select %p220, %s23, 0
        %s222 = scalar_lea.vmem %s2, %s221
        %s223 = smul.u32 8, %s24
        %s225 = smul.u32 %s24, 8
        %s226 = smul.u32 %s225, 3
        %s227 = smul.addr %s226, 4
        %s228 = scalar_lea.vmem %s215, %s227
        %v229 = vld [vmem:[%s228] sm:$0xf]
        %v230 = vld [vmem:[%s228 + $0x4] sm:$0xf]
        %v231 = vld [vmem:[%s228 + $0xc] sm:$0xf]
        %v232 = vld [vmem:[%s228 + $0x10] sm:$0xf]
        %v233 = vld [vmem:[%s228 + $0x18] sm:$0xf]
        %v234 = vld [vmem:[%s228 + $0x1c] sm:$0xf]
        %v235 = vld [vmem:[%s228 + $0x24] sm:$0xf]
        %v236 = vld [vmem:[%s228 + $0x28] sm:$0xf]
        %v237 = vld [vmem:[%s228 + $0x30] sm:$0xf]
        %v238 = vld [vmem:[%s228 + $0x34] sm:$0xf]
        %v239 = vld [vmem:[%s228 + $0x3c] sm:$0xf]
        %v240 = vld [vmem:[%s228 + $0x40] sm:$0xf]
        %v241 = vld [vmem:[%s228 + $0x48] sm:$0xf]
        %v242 = vld [vmem:[%s228 + $0x4c] sm:$0xf]
        %v243 = vld [vmem:[%s228 + $0x54] sm:$0xf]
        %v244 = vld [vmem:[%s228 + $0x58] sm:$0xf]
        %v245 = vld [vmem:[%s219] sm:$0xf]
        %v246 = vld [vmem:[%s219 + $0x4] sm:$0xf]
        %v247 = vld [vmem:[%s219 + $0x8] sm:$0xf]
        %v248 = vld [vmem:[%s219 + $0xc] sm:$0xf]
        %v249 = vld [vmem:[%s228 + $0x8] sm:$0x1]
        %v250 = vld [vmem:[%s228 + $0x14] sm:$0x1]
        %v251 = vld [vmem:[%s228 + $0x20] sm:$0x1]
        %v252 = vld [vmem:[%s228 + $0x2c] sm:$0x1]
        %v253 = vld [vmem:[%s228 + $0x38] sm:$0x1]
        %v254 = vld [vmem:[%s228 + $0x44] sm:$0x1]
        %v255 = vld [vmem:[%s228 + $0x50] sm:$0x1]
        %v256 = vld [vmem:[%s228 + $0x5c] sm:$0x1]
        %vm257 = vsmask.f32 3328
        %vm258 = vsmask.f32 7440
        %vm259 = vmor %vm257, %vm258
        %v261 = vshrl.u32 %v229, 16
        %v263 = vrot.slane %v261, 4
        %v264 = vshll.u32 %v229, 16
        %v266 = vrot.slane %v264, 5
        %v267 = vor.u32 %v263, %v266
        %v268 = vrot.slane %v267, 4
        %v270 = vshll.u32 %v230, 16
        %v272 = vrot.slane %v270, 5
        %v273 = vsel %vm259, %v268, %v272
        %v274 = vshrl.u32 %v230, 16
        %v276 = vrot.slane %v274, 4
        %v277 = vor.u32 %v276, %v272
        %v278 = vrot.slane %v277, 4
        %v280 = vshll.u32 %v249, 16
        %v282 = vrot.slane %v280, 5
        %v283 = vsel %vm259, %v278, %v282
        %v285 = vshrl.u32 %v231, 16
        %v287 = vrot.slane %v285, 4
        %v288 = vshll.u32 %v231, 16
        %v290 = vrot.slane %v288, 5
        %v291 = vor.u32 %v287, %v290
        %v292 = vrot.slane %v291, 4
        %v294 = vshll.u32 %v232, 16
        %v296 = vrot.slane %v294, 5
        %v297 = vsel %vm259, %v292, %v296
        %v298 = vshrl.u32 %v232, 16
        %v300 = vrot.slane %v298, 4
        %v301 = vor.u32 %v300, %v296
        %v302 = vrot.slane %v301, 4
        %v304 = vshll.u32 %v250, 16
        %v306 = vrot.slane %v304, 5
        %v307 = vsel %vm259, %v302, %v306
        %v309 = vshrl.u32 %v233, 16
        %v311 = vrot.slane %v309, 4
        %v312 = vshll.u32 %v233, 16
        %v314 = vrot.slane %v312, 5
        %v315 = vor.u32 %v311, %v314
        %v316 = vrot.slane %v315, 4
        %v318 = vshll.u32 %v234, 16
        %v320 = vrot.slane %v318, 5
        %v321 = vsel %vm259, %v316, %v320
        %v322 = vshrl.u32 %v234, 16
        %v324 = vrot.slane %v322, 4
        %v325 = vor.u32 %v324, %v320
        %v326 = vrot.slane %v325, 4
        %v328 = vshll.u32 %v251, 16
        %v330 = vrot.slane %v328, 5
        %v331 = vsel %vm259, %v326, %v330
        %v333 = vshrl.u32 %v235, 16
        %v335 = vrot.slane %v333, 4
        %v336 = vshll.u32 %v235, 16
        %v338 = vrot.slane %v336, 5
        %v339 = vor.u32 %v335, %v338
        %v340 = vrot.slane %v339, 4
        %v342 = vshll.u32 %v236, 16
        %v344 = vrot.slane %v342, 5
        %v345 = vsel %vm259, %v340, %v344
        %v346 = vshrl.u32 %v236, 16
        %v348 = vrot.slane %v346, 4
        %v349 = vor.u32 %v348, %v344
        %v350 = vrot.slane %v349, 4
        %v352 = vshll.u32 %v252, 16
        %v354 = vrot.slane %v352, 5
        %v355 = vsel %vm259, %v350, %v354
        %v357 = vshrl.u32 %v237, 16
        %v359 = vrot.slane %v357, 4
        %v360 = vshll.u32 %v237, 16
        %v362 = vrot.slane %v360, 5
        %v363 = vor.u32 %v359, %v362
        %v364 = vrot.slane %v363, 4
        %v366 = vshll.u32 %v238, 16
        %v368 = vrot.slane %v366, 5
        %v369 = vsel %vm259, %v364, %v368
        %v370 = vshrl.u32 %v238, 16
        %v372 = vrot.slane %v370, 4
        %v373 = vor.u32 %v372, %v368
        %v374 = vrot.slane %v373, 4
        %v376 = vshll.u32 %v253, 16
        %v378 = vrot.slane %v376, 5
        %v379 = vsel %vm259, %v374, %v378
        %v381 = vshrl.u32 %v239, 16
        %v383 = vrot.slane %v381, 4
        %v384 = vshll.u32 %v239, 16
        %v386 = vrot.slane %v384, 5
        %v387 = vor.u32 %v383, %v386
        %v388 = vrot.slane %v387, 4
        %v390 = vshll.u32 %v240, 16
        %v392 = vrot.slane %v390, 5
        %v393 = vsel %vm259, %v388, %v392
        %v394 = vshrl.u32 %v240, 16
        %v396 = vrot.slane %v394, 4
        %v397 = vor.u32 %v396, %v392
        %v398 = vrot.slane %v397, 4
        %v400 = vshll.u32 %v254, 16
        %v402 = vrot.slane %v400, 5
        %v403 = vsel %vm259, %v398, %v402
        %v405 = vshrl.u32 %v241, 16
        %v407 = vrot.slane %v405, 4
        %v408 = vshll.u32 %v241, 16
        %v410 = vrot.slane %v408, 5
        %v411 = vor.u32 %v407, %v410
        %v412 = vrot.slane %v411, 4
        %v414 = vshll.u32 %v242, 16
        %v416 = vrot.slane %v414, 5
        %v417 = vsel %vm259, %v412, %v416
        %v418 = vshrl.u32 %v242, 16
        %v420 = vrot.slane %v418, 4
        %v421 = vor.u32 %v420, %v416
        %v422 = vrot.slane %v421, 4
        %v424 = vshll.u32 %v255, 16
        %v426 = vrot.slane %v424, 5
        %v427 = vsel %vm259, %v422, %v426
        %v429 = vshrl.u32 %v243, 16
        %v431 = vrot.slane %v429, 4
        %v432 = vshll.u32 %v243, 16
        %v434 = vrot.slane %v432, 5
        %v435 = vor.u32 %v431, %v434
        %v436 = vrot.slane %v435, 4
        %v438 = vshll.u32 %v244, 16
        %v440 = vrot.slane %v438, 5
        %v441 = vsel %vm259, %v436, %v440
        %v442 = vshrl.u32 %v244, 16
        %v444 = vrot.slane %v442, 4
        %v445 = vor.u32 %v444, %v440
        %v446 = vrot.slane %v445, 4
        %v448 = vshll.u32 %v256, 16
        %v450 = vrot.slane %v448, 5
        %v451 = vsel %vm259, %v446, %v450
        %s452 = scalar_lea.vmem %s219, 16
        %v453 = vld [vmem:[%s452] sm:$0xf]
        %v454 = vld [vmem:[%s452 + $0x4] sm:$0xf]
        %v455 = vld [vmem:[%s452 + $0x8] sm:$0xf]
        %v456 = vld [vmem:[%s452 + $0xc] sm:$0xf]
        %v457 = vunpack.c.l.b16 %v273
        %v458 = vunpack.c.l.b16 %v283
        %v459 = vunpack.c.l.b16 %v297
        %v460 = vunpack.c.l.b16 %v307
        %v461 = vunpack.c.l.b16 %v321
        %v462 = vunpack.c.l.b16 %v331
        %v463 = vunpack.c.l.b16 %v345
        %v464 = vunpack.c.l.b16 %v355
        %v465 = vunpack.c.l.b16 %v369
        %v466 = vunpack.c.l.b16 %v379
        %v467 = vunpack.c.l.b16 %v393
        %v468 = vunpack.c.l.b16 %v403
        %v469 = vunpack.c.l.b16 %v417
        %v470 = vunpack.c.l.b16 %v427
        %v471 = vunpack.c.l.b16 %v441
        %v472 = vunpack.c.l.b16 %v451
        %v473 = vpack.c.b16 %v458, %v457
        %v474 = vpack.c.b16 %v460, %v459
        %v475 = vpack.c.b16 %v462, %v461
        %v476 = vpack.c.b16 %v464, %v463
        %v477 = vpack.c.b16 %v466, %v465
        %v478 = vpack.c.b16 %v468, %v467
        %v479 = vpack.c.b16 %v470, %v469
        %v480 = vpack.c.b16 %v472, %v471
        %v485 = vunpack.c.l.b16 %v453
        %v486 = vunpack.c.l.b16 %v454
        %v487 = vunpack.c.l.b16 %v455
        %v488 = vunpack.c.l.b16 %v456
        %v489 = vpack.c.b16 %v486, %v485
        %v490 = vpack.c.b16 %v488, %v487
        %vm493 = vcmask 261120
        %v495 = vsel %vm493, %v473, 0
        %v498 = vsel %vm493, %v474, 0
        %v501 = vsel %vm493, %v475, 0
        %v504 = vsel %vm493, %v476, 0
        %v507 = vsel %vm493, %v477, 0
        %v510 = vsel %vm493, %v478, 0
        %v513 = vsel %vm493, %v479, 0
        %v516 = vsel %vm493, %v480, 0
        %518 = vmatprep.subr.bf16.mxu0 0
        %519 = vmatpush1.bf16.msra.mxu0 0
        %520 = vmatprep.subr.bf16.mxu0 0
        %521 = vmatpush1.bf16.msra.mxu0 0
        %522 = vmatprep.subr.bf16.mxu0 0
        %523 = vmatpush1.bf16.msra.mxu0 0
        %524 = vmatprep.subr.bf16.mxu0 0
        %525 = vmatpush1.bf16.msra.mxu0 0
        %526 = vmatprep.subr.bf16.mxu0 0
        %527 = vmatpush1.bf16.msra.mxu0 0
        %528 = vmatprep.subr.bf16.mxu0 0
        %529 = vmatpush1.bf16.msra.mxu0 0
        %530 = vmatprep.subr.bf16.mxu0 0
        %531 = vmatpush1.bf16.msra.mxu0 %v490
        %532 = vmatprep.subr.bf16.mxu0 0
        %533 = vmatpush1.bf16.msra.mxu0 %v489
        %534 = vmatprep.subr.bf16.mxu0 0
        %535 = vmatpush2.bf16.msra.mxu0 0
        %536 = vmatprep.subr.bf16.mxu0 0
        %537 = vmatpush2.bf16.msra.mxu0 0
        %538 = vmatprep.subr.bf16.mxu0 0
        %539 = vmatpush2.bf16.msra.mxu0 0
        %540 = vmatprep.subr.bf16.mxu0 0
        %541 = vmatpush2.bf16.msra.mxu0 0
        %542 = vmatprep.subr.bf16.mxu0 0
        %543 = vmatpush2.bf16.msra.mxu0 0
        %544 = vmatprep.subr.bf16.mxu0 0
        %545 = vmatpush2.bf16.msra.mxu0 0
        %546 = vmatprep.subr.bf16.mxu0 0
        %547 = vmatpush2.bf16.msra.mxu0 0
        %548 = vmatprep.subr.bf16.mxu0 0
        %549 = vmatpush2.bf16.msra.mxu0 0
        %550 = vmatprep.mubr.bf16.mxu0 0
        %551 = vmatmul.mubr.bf16.gmra.mxu0 %v495
        %v552 = vpop.f32.mrf.mxu0
        %v553 = vadd.f32 0.0, %v552
        %v554 = vpop.f32.mrf.mxu0
        %v555 = vpop.f32.mrf.mxu0
        %v556 = vadd.f32 0.0, %v555
        %v557 = vpop.f32.mrf.mxu0
        %558 = vmatprep.mubr.bf16.mxu0 0
        %559 = vmatmul.mubr.bf16.gmra.mxu0 %v498
        %v560 = vpop.f32.mrf.mxu0
        %v561 = vadd.f32 0.0, %v560
        %v562 = vpop.f32.mrf.mxu0
        %v563 = vpop.f32.mrf.mxu0
        %v564 = vadd.f32 0.0, %v563
        %v565 = vpop.f32.mrf.mxu0
        %566 = vmatprep.mubr.bf16.mxu0 0
        %567 = vmatmul.mubr.bf16.gmra.mxu0 %v501
        %v568 = vpop.f32.mrf.mxu0
        %v569 = vadd.f32 0.0, %v568
        %v570 = vpop.f32.mrf.mxu0
        %v571 = vpop.f32.mrf.mxu0
        %v572 = vadd.f32 0.0, %v571
        %v573 = vpop.f32.mrf.mxu0
        %574 = vmatprep.mubr.bf16.mxu0 0
        %575 = vmatmul.mubr.bf16.gmra.mxu0 %v504
        %v576 = vpop.f32.mrf.mxu0
        %v577 = vadd.f32 0.0, %v576
        %v578 = vpop.f32.mrf.mxu0
        %v579 = vpop.f32.mrf.mxu0
        %v580 = vadd.f32 0.0, %v579
        %v581 = vpop.f32.mrf.mxu0
        %582 = vmatprep.mubr.bf16.mxu0 0
        %583 = vmatmul.mubr.bf16.gmra.mxu0 %v507
        %v584 = vpop.f32.mrf.mxu0
        %v585 = vadd.f32 0.0, %v584
        %v586 = vpop.f32.mrf.mxu0
        %v587 = vpop.f32.mrf.mxu0
        %v588 = vadd.f32 0.0, %v587
        %v589 = vpop.f32.mrf.mxu0
        %590 = vmatprep.mubr.bf16.mxu0 0
        %591 = vmatmul.mubr.bf16.gmra.mxu0 %v510
        %v592 = vpop.f32.mrf.mxu0
        %v593 = vadd.f32 0.0, %v592
        %v594 = vpop.f32.mrf.mxu0
        %v595 = vpop.f32.mrf.mxu0
        %v596 = vadd.f32 0.0, %v595
        %v597 = vpop.f32.mrf.mxu0
        %598 = vmatprep.mubr.bf16.mxu0 0
        %599 = vmatmul.mubr.bf16.gmra.mxu0 %v513
        %v600 = vpop.f32.mrf.mxu0
        %v601 = vadd.f32 0.0, %v600
        %v602 = vpop.f32.mrf.mxu0
        %v603 = vpop.f32.mrf.mxu0
        %v604 = vadd.f32 0.0, %v603
        %v605 = vpop.f32.mrf.mxu0
        %606 = vmatprep.mubr.bf16.mxu0 0
        %607 = vmatmul.mubr.bf16.gmra.mxu0 %v516
        %v608 = vpop.f32.mrf.mxu0
        %v609 = vadd.f32 0.0, %v608
        %v610 = vpop.f32.mrf.mxu0
        %v611 = vpop.f32.mrf.mxu0
        %v612 = vadd.f32 0.0, %v611
        %v613 = vpop.f32.mrf.mxu0
        %614 = vdwg.mxu0
        %v631 = vunpack.c.l.b16 %v229
        %v632 = vunpack.c.l.b16 %v230
        %v633 = vunpack.c.l.b16 %v231
        %v634 = vunpack.c.l.b16 %v232
        %v635 = vunpack.c.l.b16 %v233
        %v636 = vunpack.c.l.b16 %v234
        %v637 = vunpack.c.l.b16 %v235
        %v638 = vunpack.c.l.b16 %v236
        %v639 = vunpack.c.l.b16 %v237
        %v640 = vunpack.c.l.b16 %v238
        %v641 = vunpack.c.l.b16 %v239
        %v642 = vunpack.c.l.b16 %v240
        %v643 = vunpack.c.l.b16 %v241
        %v644 = vunpack.c.l.b16 %v242
        %v645 = vunpack.c.l.b16 %v243
        %v646 = vunpack.c.l.b16 %v244
        %v647 = vpack.c.b16 %v632, %v631
        %v648 = vpack.c.b16 %v634, %v633
        %v649 = vpack.c.b16 %v636, %v635
        %v650 = vpack.c.b16 %v638, %v637
        %v651 = vpack.c.b16 %v640, %v639
        %v652 = vpack.c.b16 %v642, %v641
        %v653 = vpack.c.b16 %v644, %v643
        %v654 = vpack.c.b16 %v646, %v645
        %v659 = vunpack.c.l.b16 %v245
        %v660 = vunpack.c.l.b16 %v246
        %v661 = vunpack.c.l.b16 %v247
        %v662 = vunpack.c.l.b16 %v248
        %v663 = vpack.c.b16 %v660, %v659
        %v664 = vpack.c.b16 %v662, %v661
        %v668 = vsel %vm493, %v647, 0
        %v671 = vsel %vm493, %v648, 0
        %v674 = vsel %vm493, %v649, 0
        %v677 = vsel %vm493, %v650, 0
        %v680 = vsel %vm493, %v651, 0
        %v683 = vsel %vm493, %v652, 0
        %v686 = vsel %vm493, %v653, 0
        %v689 = vsel %vm493, %v654, 0
        %691 = vmatprep.subr.bf16.mxu0 0
        %692 = vmatpush1.bf16.msra.mxu0 0
        %693 = vmatprep.subr.bf16.mxu0 0
        %694 = vmatpush1.bf16.msra.mxu0 0
        %695 = vmatprep.subr.bf16.mxu0 0
        %696 = vmatpush1.bf16.msra.mxu0 0
        %697 = vmatprep.subr.bf16.mxu0 0
        %698 = vmatpush1.bf16.msra.mxu0 0
        %699 = vmatprep.subr.bf16.mxu0 0
        %700 = vmatpush1.bf16.msra.mxu0 0
        %701 = vmatprep.subr.bf16.mxu0 0
        %702 = vmatpush1.bf16.msra.mxu0 0
        %703 = vmatprep.subr.bf16.mxu0 0
        %704 = vmatpush1.bf16.msra.mxu0 %v664
        %705 = vmatprep.subr.bf16.mxu0 0
        %706 = vmatpush1.bf16.msra.mxu0 %v663
        %707 = vmatprep.subr.bf16.mxu0 0
        %708 = vmatpush2.bf16.msra.mxu0 0
        %709 = vmatprep.subr.bf16.mxu0 0
        %710 = vmatpush2.bf16.msra.mxu0 0
        %711 = vmatprep.subr.bf16.mxu0 0
        %712 = vmatpush2.bf16.msra.mxu0 0
        %713 = vmatprep.subr.bf16.mxu0 0
        %714 = vmatpush2.bf16.msra.mxu0 0
        %715 = vmatprep.subr.bf16.mxu0 0
        %716 = vmatpush2.bf16.msra.mxu0 0
        %717 = vmatprep.subr.bf16.mxu0 0
        %718 = vmatpush2.bf16.msra.mxu0 0
        %719 = vmatprep.subr.bf16.mxu0 0
        %720 = vmatpush2.bf16.msra.mxu0 0
        %721 = vmatprep.subr.bf16.mxu0 0
        %722 = vmatpush2.bf16.msra.mxu0 0
        %723 = vmatprep.mubr.bf16.mxu0 0
        %724 = vmatmul.mubr.bf16.gmra.mxu0 %v668
        %v725 = vpop.f32.mrf.mxu0
        %v726 = vadd.f32 %v553, %v725
        %v727 = vpop.f32.mrf.mxu0
        %v728 = vpop.f32.mrf.mxu0
        %v729 = vadd.f32 %v556, %v728
        %v730 = vpop.f32.mrf.mxu0
        %731 = vmatprep.mubr.bf16.mxu0 0
        %732 = vmatmul.mubr.bf16.gmra.mxu0 %v671
        %v733 = vpop.f32.mrf.mxu0
        %v734 = vadd.f32 %v561, %v733
        %v735 = vpop.f32.mrf.mxu0
        %v736 = vpop.f32.mrf.mxu0
        %v737 = vadd.f32 %v564, %v736
        %v738 = vpop.f32.mrf.mxu0
        %739 = vmatprep.mubr.bf16.mxu0 0
        %740 = vmatmul.mubr.bf16.gmra.mxu0 %v674
        %v741 = vpop.f32.mrf.mxu0
        %v742 = vadd.f32 %v569, %v741
        %v743 = vpop.f32.mrf.mxu0
        %v744 = vpop.f32.mrf.mxu0
        %v745 = vadd.f32 %v572, %v744
        %v746 = vpop.f32.mrf.mxu0
        %747 = vmatprep.mubr.bf16.mxu0 0
        %748 = vmatmul.mubr.bf16.gmra.mxu0 %v677
        %v749 = vpop.f32.mrf.mxu0
        %v750 = vadd.f32 %v577, %v749
        %v751 = vpop.f32.mrf.mxu0
        %v752 = vpop.f32.mrf.mxu0
        %v753 = vadd.f32 %v580, %v752
        %v754 = vpop.f32.mrf.mxu0
        %755 = vmatprep.mubr.bf16.mxu0 0
        %756 = vmatmul.mubr.bf16.gmra.mxu0 %v680
        %v757 = vpop.f32.mrf.mxu0
        %v758 = vadd.f32 %v585, %v757
        %v759 = vpop.f32.mrf.mxu0
        %v760 = vpop.f32.mrf.mxu0
        %v761 = vadd.f32 %v588, %v760
        %v762 = vpop.f32.mrf.mxu0
        %763 = vmatprep.mubr.bf16.mxu0 0
        %764 = vmatmul.mubr.bf16.gmra.mxu0 %v683
        %v765 = vpop.f32.mrf.mxu0
        %v766 = vadd.f32 %v593, %v765
        %v767 = vpop.f32.mrf.mxu0
        %v768 = vpop.f32.mrf.mxu0
        %v769 = vadd.f32 %v596, %v768
        %v770 = vpop.f32.mrf.mxu0
        %771 = vmatprep.mubr.bf16.mxu0 0
        %772 = vmatmul.mubr.bf16.gmra.mxu0 %v686
        %v773 = vpop.f32.mrf.mxu0
        %v774 = vadd.f32 %v601, %v773
        %v775 = vpop.f32.mrf.mxu0
        %v776 = vpop.f32.mrf.mxu0
        %v777 = vadd.f32 %v604, %v776
        %v778 = vpop.f32.mrf.mxu0
        %779 = vmatprep.mubr.bf16.mxu0 0
        %780 = vmatmul.mubr.bf16.gmra.mxu0 %v689
        %v781 = vpop.f32.mrf.mxu0
        %v782 = vadd.f32 %v609, %v781
        %v783 = vpop.f32.mrf.mxu0
        %v784 = vpop.f32.mrf.mxu0
        %v785 = vadd.f32 %v612, %v784
        %v786 = vpop.f32.mrf.mxu0
        %787 = vdwg.mxu0
        %v788 = vld [vmem:[%s228] sm:$0xe]
        %v789 = vld [vmem:[%s228 + $0xc] sm:$0xe]
        %v790 = vld [vmem:[%s228 + $0x18] sm:$0xe]
        %v791 = vld [vmem:[%s228 + $0x24] sm:$0xe]
        %v792 = vld [vmem:[%s228 + $0x30] sm:$0xe]
        %v793 = vld [vmem:[%s228 + $0x3c] sm:$0xe]
        %v794 = vld [vmem:[%s228 + $0x48] sm:$0xe]
        %v795 = vld [vmem:[%s228 + $0x54] sm:$0xe]
        %vm812 = vcmask 1042432
        %vm813 = vcmask 1046532
        %vm814 = vmor %vm812, %vm813
        %v815 = vrot.slane %v788, 5
        %v816 = vrot.slane %v815, 4
        %v817 = vrot.slane %v230, 5
        %v818 = vsel %vm814, %v816, %v817
        %v819 = vrot.slane %v817, 4
        %v820 = vrot.slane %v249, 5
        %v821 = vsel %vm814, %v819, %v820
        %v822 = vrot.slane %v789, 5
        %v823 = vrot.slane %v822, 4
        %v824 = vrot.slane %v232, 5
        %v825 = vsel %vm814, %v823, %v824
        %v826 = vrot.slane %v824, 4
        %v827 = vrot.slane %v250, 5
        %v828 = vsel %vm814, %v826, %v827
        %v829 = vrot.slane %v790, 5
        %v830 = vrot.slane %v829, 4
        %v831 = vrot.slane %v234, 5
        %v832 = vsel %vm814, %v830, %v831
        %v833 = vrot.slane %v831, 4
        %v834 = vrot.slane %v251, 5
        %v835 = vsel %vm814, %v833, %v834
        %v836 = vrot.slane %v791, 5
        %v837 = vrot.slane %v836, 4
        %v838 = vrot.slane %v236, 5
        %v839 = vsel %vm814, %v837, %v838
        %v840 = vrot.slane %v838, 4
        %v841 = vrot.slane %v252, 5
        %v842 = vsel %vm814, %v840, %v841
        %v843 = vrot.slane %v792, 5
        %v844 = vrot.slane %v843, 4
        %v845 = vrot.slane %v238, 5
        %v846 = vsel %vm814, %v844, %v845
        %v847 = vrot.slane %v845, 4
        %v848 = vrot.slane %v253, 5
        %v849 = vsel %vm814, %v847, %v848
        %v850 = vrot.slane %v793, 5
        %v851 = vrot.slane %v850, 4
        %v852 = vrot.slane %v240, 5
        %v853 = vsel %vm814, %v851, %v852
        %v854 = vrot.slane %v852, 4
        %v855 = vrot.slane %v254, 5
        %v856 = vsel %vm814, %v854, %v855
        %v857 = vrot.slane %v794, 5
        %v858 = vrot.slane %v857, 4
        %v859 = vrot.slane %v242, 5
        %v860 = vsel %vm814, %v858, %v859
        %v861 = vrot.slane %v859, 4
        %v862 = vrot.slane %v255, 5
        %v863 = vsel %vm814, %v861, %v862
        %v864 = vrot.slane %v795, 5
        %v865 = vrot.slane %v864, 4
        %v866 = vrot.slane %v244, 5
        %v867 = vsel %vm814, %v865, %v866
        %v868 = vrot.slane %v866, 4
        %v869 = vrot.slane %v256, 5
        %v870 = vsel %vm814, %v868, %v869
        %s871 = scalar_lea.vmem %s219, 32
        %v872 = vld [vmem:[%s871] sm:$0xf]
        %v873 = vld [vmem:[%s871 + $0x4] sm:$0xf]
        %v874 = vld [vmem:[%s871 + $0x8] sm:$0xf]
        %v875 = vld [vmem:[%s871 + $0xc] sm:$0xf]
        %v876 = vunpack.c.l.b16 %v818
        %v877 = vunpack.c.l.b16 %v821
        %v878 = vunpack.c.l.b16 %v825
        %v879 = vunpack.c.l.b16 %v828
        %v880 = vunpack.c.l.b16 %v832
        %v881 = vunpack.c.l.b16 %v835
        %v882 = vunpack.c.l.b16 %v839
        %v883 = vunpack.c.l.b16 %v842
        %v884 = vunpack.c.l.b16 %v846
        %v885 = vunpack.c.l.b16 %v849
        %v886 = vunpack.c.l.b16 %v853
        %v887 = vunpack.c.l.b16 %v856
        %v888 = vunpack.c.l.b16 %v860
        %v889 = vunpack.c.l.b16 %v863
        %v890 = vunpack.c.l.b16 %v867
        %v891 = vunpack.c.l.b16 %v870
        %v892 = vpack.c.b16 %v877, %v876
        %v893 = vpack.c.b16 %v879, %v878
        %v894 = vpack.c.b16 %v881, %v880
        %v895 = vpack.c.b16 %v883, %v882
        %v896 = vpack.c.b16 %v885, %v884
        %v897 = vpack.c.b16 %v887, %v886
        %v898 = vpack.c.b16 %v889, %v888
        %v899 = vpack.c.b16 %v891, %v890
        %v904 = vunpack.c.l.b16 %v872
        %v905 = vunpack.c.l.b16 %v873
        %v906 = vunpack.c.l.b16 %v874
        %v907 = vunpack.c.l.b16 %v875
        %v908 = vpack.c.b16 %v905, %v904
        %v909 = vpack.c.b16 %v907, %v906
        %v913 = vsel %vm493, %v892, 0
        %v916 = vsel %vm493, %v893, 0
        %v919 = vsel %vm493, %v894, 0
        %v922 = vsel %vm493, %v895, 0
        %v925 = vsel %vm493, %v896, 0
        %v928 = vsel %vm493, %v897, 0
        %v931 = vsel %vm493, %v898, 0
        %v934 = vsel %vm493, %v899, 0
        %936 = vmatprep.subr.bf16.mxu0 0
        %937 = vmatpush1.bf16.msra.mxu0 0
        %938 = vmatprep.subr.bf16.mxu0 0
        %939 = vmatpush1.bf16.msra.mxu0 0
        %940 = vmatprep.subr.bf16.mxu0 0
        %941 = vmatpush1.bf16.msra.mxu0 0
        %942 = vmatprep.subr.bf16.mxu0 0
        %943 = vmatpush1.bf16.msra.mxu0 0
        %944 = vmatprep.subr.bf16.mxu0 0
        %945 = vmatpush1.bf16.msra.mxu0 0
        %946 = vmatprep.subr.bf16.mxu0 0
        %947 = vmatpush1.bf16.msra.mxu0 0
        %948 = vmatprep.subr.bf16.mxu0 0
        %949 = vmatpush1.bf16.msra.mxu0 %v909
        %950 = vmatprep.subr.bf16.mxu0 0
        %951 = vmatpush1.bf16.msra.mxu0 %v908
        %952 = vmatprep.subr.bf16.mxu0 0
        %953 = vmatpush2.bf16.msra.mxu0 0
        %954 = vmatprep.subr.bf16.mxu0 0
        %955 = vmatpush2.bf16.msra.mxu0 0
        %956 = vmatprep.subr.bf16.mxu0 0
        %957 = vmatpush2.bf16.msra.mxu0 0
        %958 = vmatprep.subr.bf16.mxu0 0
        %959 = vmatpush2.bf16.msra.mxu0 0
        %960 = vmatprep.subr.bf16.mxu0 0
        %961 = vmatpush2.bf16.msra.mxu0 0
        %962 = vmatprep.subr.bf16.mxu0 0
        %963 = vmatpush2.bf16.msra.mxu0 0
        %964 = vmatprep.subr.bf16.mxu0 0
        %965 = vmatpush2.bf16.msra.mxu0 0
        %966 = vmatprep.subr.bf16.mxu0 0
        %967 = vmatpush2.bf16.msra.mxu0 0
        %968 = vmatprep.mubr.bf16.mxu0 0
        %969 = vmatmul.mubr.bf16.gmra.mxu0 %v913
        %v970 = vpop.f32.mrf.mxu0
        %v971 = vadd.f32 0.0, %v970
        %v972 = vpop.f32.mrf.mxu0
        %v973 = vpop.f32.mrf.mxu0
        %v974 = vadd.f32 0.0, %v973
        %v975 = vpop.f32.mrf.mxu0
        %976 = vmatprep.mubr.bf16.mxu0 0
        %977 = vmatmul.mubr.bf16.gmra.mxu0 %v916
        %v978 = vpop.f32.mrf.mxu0
        %v979 = vadd.f32 0.0, %v978
        %v980 = vpop.f32.mrf.mxu0
        %v981 = vpop.f32.mrf.mxu0
        %v982 = vadd.f32 0.0, %v981
        %v983 = vpop.f32.mrf.mxu0
        %984 = vmatprep.mubr.bf16.mxu0 0
        %985 = vmatmul.mubr.bf16.gmra.mxu0 %v919
        %v986 = vpop.f32.mrf.mxu0
        %v987 = vadd.f32 0.0, %v986
        %v988 = vpop.f32.mrf.mxu0
        %v989 = vpop.f32.mrf.mxu0
        %v990 = vadd.f32 0.0, %v989
        %v991 = vpop.f32.mrf.mxu0
        %992 = vmatprep.mubr.bf16.mxu0 0
        %993 = vmatmul.mubr.bf16.gmra.mxu0 %v922
        %v994 = vpop.f32.mrf.mxu0
        %v995 = vadd.f32 0.0, %v994
        %v996 = vpop.f32.mrf.mxu0
        %v997 = vpop.f32.mrf.mxu0
        %v998 = vadd.f32 0.0, %v997
        %v999 = vpop.f32.mrf.mxu0
        %1000 = vmatprep.mubr.bf16.mxu0 0
        %1001 = vmatmul.mubr.bf16.gmra.mxu0 %v925
        %v1002 = vpop.f32.mrf.mxu0
        %v1003 = vadd.f32 0.0, %v1002
        %v1004 = vpop.f32.mrf.mxu0
        %v1005 = vpop.f32.mrf.mxu0
        %v1006 = vadd.f32 0.0, %v1005
        %v1007 = vpop.f32.mrf.mxu0
        %1008 = vmatprep.mubr.bf16.mxu0 0
        %1009 = vmatmul.mubr.bf16.gmra.mxu0 %v928
        %v1010 = vpop.f32.mrf.mxu0
        %v1011 = vadd.f32 0.0, %v1010
        %v1012 = vpop.f32.mrf.mxu0
        %v1013 = vpop.f32.mrf.mxu0
        %v1014 = vadd.f32 0.0, %v1013
        %v1015 = vpop.f32.mrf.mxu0
        %1016 = vmatprep.mubr.bf16.mxu0 0
        %1017 = vmatmul.mubr.bf16.gmra.mxu0 %v931
        %v1018 = vpop.f32.mrf.mxu0
        %v1019 = vadd.f32 0.0, %v1018
        %v1020 = vpop.f32.mrf.mxu0
        %v1021 = vpop.f32.mrf.mxu0
        %v1022 = vadd.f32 0.0, %v1021
        %v1023 = vpop.f32.mrf.mxu0
        %1024 = vmatprep.mubr.bf16.mxu0 0
        %1025 = vmatmul.mubr.bf16.gmra.mxu0 %v934
        %v1026 = vpop.f32.mrf.mxu0
        %v1027 = vadd.f32 0.0, %v1026
        %v1028 = vpop.f32.mrf.mxu0
        %v1029 = vpop.f32.mrf.mxu0
        %v1030 = vadd.f32 0.0, %v1029
        %v1031 = vpop.f32.mrf.mxu0
        %1032 = vdwg.mxu0
        %v1033 = vadd.f32 %v726, %v971
        %v1034 = vadd.f32 %v729, %v974
        %v1035 = vadd.f32 %v734, %v979
        %v1036 = vadd.f32 %v737, %v982
        %v1037 = vadd.f32 %v742, %v987
        %v1038 = vadd.f32 %v745, %v990
        %v1039 = vadd.f32 %v750, %v995
        %v1040 = vadd.f32 %v753, %v998
        %v1041 = vadd.f32 %v758, %v1003
        %v1042 = vadd.f32 %v761, %v1006
        %v1043 = vadd.f32 %v766, %v1011
        %v1044 = vadd.f32 %v769, %v1014
        %v1045 = vadd.f32 %v774, %v1019
        %v1046 = vadd.f32 %v777, %v1022
        %v1047 = vadd.f32 %v782, %v1027
        %v1048 = vadd.f32 %v785, %v1030
        %s1049 = sadd.s32 %s225, 1
        %s1050 = smul.u32 %s1049, 3
        %s1051 = smul.addr %s1050, 4
        %s1052 = scalar_lea.vmem %s215, %s1051
        %v1053 = vld [vmem:[%s1052] sm:$0xf]
        %v1054 = vld [vmem:[%s1052 + $0x4] sm:$0xf]
        %v1055 = vld [vmem:[%s1052 + $0xc] sm:$0xf]
        %v1056 = vld [vmem:[%s1052 + $0x10] sm:$0xf]
        %v1057 = vld [vmem:[%s1052 + $0x18] sm:$0xf]
        %v1058 = vld [vmem:[%s1052 + $0x1c] sm:$0xf]
        %v1059 = vld [vmem:[%s1052 + $0x24] sm:$0xf]
        %v1060 = vld [vmem:[%s1052 + $0x28] sm:$0xf]
        %v1061 = vld [vmem:[%s1052 + $0x30] sm:$0xf]
        %v1062 = vld [vmem:[%s1052 + $0x34] sm:$0xf]
        %v1063 = vld [vmem:[%s1052 + $0x3c] sm:$0xf]
        %v1064 = vld [vmem:[%s1052 + $0x40] sm:$0xf]
        %v1065 = vld [vmem:[%s1052 + $0x48] sm:$0xf]
        %v1066 = vld [vmem:[%s1052 + $0x4c] sm:$0xf]
        %v1067 = vld [vmem:[%s1052 + $0x54] sm:$0xf]
        %v1068 = vld [vmem:[%s1052 + $0x58] sm:$0xf]
        %s1069 = scalar_lea.vmem %s219, 48
        %v1070 = vld [vmem:[%s1069] sm:$0xf]
        %v1071 = vld [vmem:[%s1069 + $0x4] sm:$0xf]
        %v1072 = vld [vmem:[%s1069 + $0x8] sm:$0xf]
        %v1073 = vld [vmem:[%s1069 + $0xc] sm:$0xf]
        %v1090 = vunpack.c.l.b16 %v1053
        %v1091 = vunpack.c.l.b16 %v1054
        %v1092 = vunpack.c.l.b16 %v1055
        %v1093 = vunpack.c.l.b16 %v1056
        %v1094 = vunpack.c.l.b16 %v1057
        %v1095 = vunpack.c.l.b16 %v1058
        %v1096 = vunpack.c.l.b16 %v1059
        %v1097 = vunpack.c.l.b16 %v1060
        %v1098 = vunpack.c.l.b16 %v1061
        %v1099 = vunpack.c.l.b16 %v1062
        %v1100 = vunpack.c.l.b16 %v1063
        %v1101 = vunpack.c.l.b16 %v1064
        %v1102 = vunpack.c.l.b16 %v1065
        %v1103 = vunpack.c.l.b16 %v1066
        %v1104 = vunpack.c.l.b16 %v1067
        %v1105 = vunpack.c.l.b16 %v1068
        %v1106 = vpack.c.b16 %v1091, %v1090
        %v1107 = vpack.c.b16 %v1093, %v1092
        %v1108 = vpack.c.b16 %v1095, %v1094
        %v1109 = vpack.c.b16 %v1097, %v1096
        %v1110 = vpack.c.b16 %v1099, %v1098
        %v1111 = vpack.c.b16 %v1101, %v1100
        %v1112 = vpack.c.b16 %v1103, %v1102
        %v1113 = vpack.c.b16 %v1105, %v1104
        %v1118 = vunpack.c.l.b16 %v1070
        %v1119 = vunpack.c.l.b16 %v1071
        %v1120 = vunpack.c.l.b16 %v1072
        %v1121 = vunpack.c.l.b16 %v1073
        %v1122 = vpack.c.b16 %v1119, %v1118
        %v1123 = vpack.c.b16 %v1121, %v1120
        %v1127 = vsel %vm493, %v1106, 0
        %v1130 = vsel %vm493, %v1107, 0
        %v1133 = vsel %vm493, %v1108, 0
        %v1136 = vsel %vm493, %v1109, 0
        %v1139 = vsel %vm493, %v1110, 0
        %v1142 = vsel %vm493, %v1111, 0
        %v1145 = vsel %vm493, %v1112, 0
        %v1148 = vsel %vm493, %v1113, 0
        %1150 = vmatprep.subr.bf16.mxu0 0
        %1151 = vmatpush1.bf16.msra.mxu0 0
        %1152 = vmatprep.subr.bf16.mxu0 0
        %1153 = vmatpush1.bf16.msra.mxu0 0
        %1154 = vmatprep.subr.bf16.mxu0 0
        %1155 = vmatpush1.bf16.msra.mxu0 0
        %1156 = vmatprep.subr.bf16.mxu0 0
        %1157 = vmatpush1.bf16.msra.mxu0 0
        %1158 = vmatprep.subr.bf16.mxu0 0
        %1159 = vmatpush1.bf16.msra.mxu0 0
        %1160 = vmatprep.subr.bf16.mxu0 0
        %1161 = vmatpush1.bf16.msra.mxu0 0
        %1162 = vmatprep.subr.bf16.mxu0 0
        %1163 = vmatpush1.bf16.msra.mxu0 %v1123
        %1164 = vmatprep.subr.bf16.mxu0 0
        %1165 = vmatpush1.bf16.msra.mxu0 %v1122
        %1166 = vmatprep.subr.bf16.mxu0 0
        %1167 = vmatpush2.bf16.msra.mxu0 0
        %1168 = vmatprep.subr.bf16.mxu0 0
        %1169 = vmatpush2.bf16.msra.mxu0 0
        %1170 = vmatprep.subr.bf16.mxu0 0
        %1171 = vmatpush2.bf16.msra.mxu0 0
        %1172 = vmatprep.subr.bf16.mxu0 0
        %1173 = vmatpush2.bf16.msra.mxu0 0
        %1174 = vmatprep.subr.bf16.mxu0 0
        %1175 = vmatpush2.bf16.msra.mxu0 0
        %1176 = vmatprep.subr.bf16.mxu0 0
        %1177 = vmatpush2.bf16.msra.mxu0 0
        %1178 = vmatprep.subr.bf16.mxu0 0
        %1179 = vmatpush2.bf16.msra.mxu0 0
        %1180 = vmatprep.subr.bf16.mxu0 0
        %1181 = vmatpush2.bf16.msra.mxu0 0
        %1182 = vmatprep.mubr.bf16.mxu0 0
        %1183 = vmatmul.mubr.bf16.gmra.mxu0 %v1127
        %v1184 = vpop.f32.mrf.mxu0
        %v1185 = vadd.f32 0.0, %v1184
        %v1186 = vpop.f32.mrf.mxu0
        %v1187 = vpop.f32.mrf.mxu0
        %v1188 = vadd.f32 0.0, %v1187
        %v1189 = vpop.f32.mrf.mxu0
        %1190 = vmatprep.mubr.bf16.mxu0 0
        %1191 = vmatmul.mubr.bf16.gmra.mxu0 %v1130
        %v1192 = vpop.f32.mrf.mxu0
        %v1193 = vadd.f32 0.0, %v1192
        %v1194 = vpop.f32.mrf.mxu0
        %v1195 = vpop.f32.mrf.mxu0
        %v1196 = vadd.f32 0.0, %v1195
        %v1197 = vpop.f32.mrf.mxu0
        %1198 = vmatprep.mubr.bf16.mxu0 0
        %1199 = vmatmul.mubr.bf16.gmra.mxu0 %v1133
        %v1200 = vpop.f32.mrf.mxu0
        %v1201 = vadd.f32 0.0, %v1200
        %v1202 = vpop.f32.mrf.mxu0
        %v1203 = vpop.f32.mrf.mxu0
        %v1204 = vadd.f32 0.0, %v1203
        %v1205 = vpop.f32.mrf.mxu0
        %1206 = vmatprep.mubr.bf16.mxu0 0
        %1207 = vmatmul.mubr.bf16.gmra.mxu0 %v1136
        %v1208 = vpop.f32.mrf.mxu0
        %v1209 = vadd.f32 0.0, %v1208
        %v1210 = vpop.f32.mrf.mxu0
        %v1211 = vpop.f32.mrf.mxu0
        %v1212 = vadd.f32 0.0, %v1211
        %v1213 = vpop.f32.mrf.mxu0
        %1214 = vmatprep.mubr.bf16.mxu0 0
        %1215 = vmatmul.mubr.bf16.gmra.mxu0 %v1139
        %v1216 = vpop.f32.mrf.mxu0
        %v1217 = vadd.f32 0.0, %v1216
        %v1218 = vpop.f32.mrf.mxu0
        %v1219 = vpop.f32.mrf.mxu0
        %v1220 = vadd.f32 0.0, %v1219
        %v1221 = vpop.f32.mrf.mxu0
        %1222 = vmatprep.mubr.bf16.mxu0 0
        %1223 = vmatmul.mubr.bf16.gmra.mxu0 %v1142
        %v1224 = vpop.f32.mrf.mxu0
        %v1225 = vadd.f32 0.0, %v1224
        %v1226 = vpop.f32.mrf.mxu0
        %v1227 = vpop.f32.mrf.mxu0
        %v1228 = vadd.f32 0.0, %v1227
        %v1229 = vpop.f32.mrf.mxu0
        %1230 = vmatprep.mubr.bf16.mxu0 0
        %1231 = vmatmul.mubr.bf16.gmra.mxu0 %v1145
        %v1232 = vpop.f32.mrf.mxu0
        %v1233 = vadd.f32 0.0, %v1232
        %v1234 = vpop.f32.mrf.mxu0
        %v1235 = vpop.f32.mrf.mxu0
        %v1236 = vadd.f32 0.0, %v1235
        %v1237 = vpop.f32.mrf.mxu0
        %1238 = vmatprep.mubr.bf16.mxu0 0
        %1239 = vmatmul.mubr.bf16.gmra.mxu0 %v1148
        %v1240 = vpop.f32.mrf.mxu0
        %v1241 = vadd.f32 0.0, %v1240
        %v1242 = vpop.f32.mrf.mxu0
        %v1243 = vpop.f32.mrf.mxu0
        %v1244 = vadd.f32 0.0, %v1243
        %v1245 = vpop.f32.mrf.mxu0
        %1246 = vdwg.mxu0
        %v1247 = vadd.f32 %v1033, %v1185
        %v1248 = vadd.f32 %v1034, %v1188
        %v1249 = vadd.f32 %v1035, %v1193
        %v1250 = vadd.f32 %v1036, %v1196
        %v1251 = vadd.f32 %v1037, %v1201
        %v1252 = vadd.f32 %v1038, %v1204
        %v1253 = vadd.f32 %v1039, %v1209
        %v1254 = vadd.f32 %v1040, %v1212
        %v1255 = vadd.f32 %v1041, %v1217
        %v1256 = vadd.f32 %v1042, %v1220
        %v1257 = vadd.f32 %v1043, %v1225
        %v1258 = vadd.f32 %v1044, %v1228
        %v1259 = vadd.f32 %v1045, %v1233
        %v1260 = vadd.f32 %v1046, %v1236
        %v1261 = vadd.f32 %v1047, %v1241
        %v1262 = vadd.f32 %v1048, %v1244
        %v1263 = vld [vmem:[%s1052] sm:$0xf]
        %v1264 = vld [vmem:[%s1052 + $0x4] sm:$0xf]
        %v1265 = vld [vmem:[%s1052 + $0x8] sm:$0x1]
        %v1266 = vld [vmem:[%s1052 + $0xc] sm:$0xf]
        %v1267 = vld [vmem:[%s1052 + $0x10] sm:$0xf]
        %v1268 = vld [vmem:[%s1052 + $0x14] sm:$0x1]
        %v1269 = vld [vmem:[%s1052 + $0x18] sm:$0xf]
        %v1270 = vld [vmem:[%s1052 + $0x1c] sm:$0xf]
        %v1271 = vld [vmem:[%s1052 + $0x20] sm:$0x1]
        %v1272 = vld [vmem:[%s1052 + $0x24] sm:$0xf]
        %v1273 = vld [vmem:[%s1052 + $0x28] sm:$0xf]
        %v1274 = vld [vmem:[%s1052 + $0x2c] sm:$0x1]
        %v1275 = vld [vmem:[%s1052 + $0x30] sm:$0xf]
        %v1276 = vld [vmem:[%s1052 + $0x34] sm:$0xf]
        %v1277 = vld [vmem:[%s1052 + $0x38] sm:$0x1]
        %v1278 = vld [vmem:[%s1052 + $0x3c] sm:$0xf]
        %v1279 = vld [vmem:[%s1052 + $0x40] sm:$0xf]
        %v1280 = vld [vmem:[%s1052 + $0x44] sm:$0x1]
        %v1281 = vld [vmem:[%s1052 + $0x48] sm:$0xf]
        %v1282 = vld [vmem:[%s1052 + $0x4c] sm:$0xf]
        %v1283 = vld [vmem:[%s1052 + $0x50] sm:$0x1]
        %v1284 = vld [vmem:[%s1052 + $0x54] sm:$0xf]
        %v1285 = vld [vmem:[%s1052 + $0x58] sm:$0xf]
        %v1286 = vld [vmem:[%s1052 + $0x5c] sm:$0x1]
        %v1288 = vshrl.u32 %v1263, 16
        %v1290 = vrot.slane %v1288, 4
        %v1291 = vshll.u32 %v1263, 16
        %v1293 = vrot.slane %v1291, 5
        %v1294 = vor.u32 %v1290, %v1293
        %v1295 = vrot.slane %v1294, 4
        %v1297 = vshll.u32 %v1264, 16
        %v1299 = vrot.slane %v1297, 5
        %v1300 = vsel %vm259, %v1295, %v1299
        %v1301 = vshrl.u32 %v1264, 16
        %v1303 = vrot.slane %v1301, 4
        %v1304 = vor.u32 %v1303, %v1299
        %v1305 = vrot.slane %v1304, 4
        %v1307 = vshll.u32 %v1265, 16
        %v1309 = vrot.slane %v1307, 5
        %v1310 = vsel %vm259, %v1305, %v1309
        %v1312 = vshrl.u32 %v1266, 16
        %v1314 = vrot.slane %v1312, 4
        %v1315 = vshll.u32 %v1266, 16
        %v1317 = vrot.slane %v1315, 5
        %v1318 = vor.u32 %v1314, %v1317
        %v1319 = vrot.slane %v1318, 4
        %v1321 = vshll.u32 %v1267, 16
        %v1323 = vrot.slane %v1321, 5
        %v1324 = vsel %vm259, %v1319, %v1323
        %v1325 = vshrl.u32 %v1267, 16
        %v1327 = vrot.slane %v1325, 4
        %v1328 = vor.u32 %v1327, %v1323
        %v1329 = vrot.slane %v1328, 4
        %v1331 = vshll.u32 %v1268, 16
        %v1333 = vrot.slane %v1331, 5
        %v1334 = vsel %vm259, %v1329, %v1333
        %v1336 = vshrl.u32 %v1269, 16
        %v1338 = vrot.slane %v1336, 4
        %v1339 = vshll.u32 %v1269, 16
        %v1341 = vrot.slane %v1339, 5
        %v1342 = vor.u32 %v1338, %v1341
        %v1343 = vrot.slane %v1342, 4
        %v1345 = vshll.u32 %v1270, 16
        %v1347 = vrot.slane %v1345, 5
        %v1348 = vsel %vm259, %v1343, %v1347
        %v1349 = vshrl.u32 %v1270, 16
        %v1351 = vrot.slane %v1349, 4
        %v1352 = vor.u32 %v1351, %v1347
        %v1353 = vrot.slane %v1352, 4
        %v1355 = vshll.u32 %v1271, 16
        %v1357 = vrot.slane %v1355, 5
        %v1358 = vsel %vm259, %v1353, %v1357
        %v1360 = vshrl.u32 %v1272, 16
        %v1362 = vrot.slane %v1360, 4
        %v1363 = vshll.u32 %v1272, 16
        %v1365 = vrot.slane %v1363, 5
        %v1366 = vor.u32 %v1362, %v1365
        %v1367 = vrot.slane %v1366, 4
        %v1369 = vshll.u32 %v1273, 16
        %v1371 = vrot.slane %v1369, 5
        %v1372 = vsel %vm259, %v1367, %v1371
        %v1373 = vshrl.u32 %v1273, 16
        %v1375 = vrot.slane %v1373, 4
        %v1376 = vor.u32 %v1375, %v1371
        %v1377 = vrot.slane %v1376, 4
        %v1379 = vshll.u32 %v1274, 16
        %v1381 = vrot.slane %v1379, 5
        %v1382 = vsel %vm259, %v1377, %v1381
        %v1384 = vshrl.u32 %v1275, 16
        %v1386 = vrot.slane %v1384, 4
        %v1387 = vshll.u32 %v1275, 16
        %v1389 = vrot.slane %v1387, 5
        %v1390 = vor.u32 %v1386, %v1389
        %v1391 = vrot.slane %v1390, 4
        %v1393 = vshll.u32 %v1276, 16
        %v1395 = vrot.slane %v1393, 5
        %v1396 = vsel %vm259, %v1391, %v1395
        %v1397 = vshrl.u32 %v1276, 16
        %v1399 = vrot.slane %v1397, 4
        %v1400 = vor.u32 %v1399, %v1395
        %v1401 = vrot.slane %v1400, 4
        %v1403 = vshll.u32 %v1277, 16
        %v1405 = vrot.slane %v1403, 5
        %v1406 = vsel %vm259, %v1401, %v1405
        %v1408 = vshrl.u32 %v1278, 16
        %v1410 = vrot.slane %v1408, 4
        %v1411 = vshll.u32 %v1278, 16
        %v1413 = vrot.slane %v1411, 5
        %v1414 = vor.u32 %v1410, %v1413
        %v1415 = vrot.slane %v1414, 4
        %v1417 = vshll.u32 %v1279, 16
        %v1419 = vrot.slane %v1417, 5
        %v1420 = vsel %vm259, %v1415, %v1419
        %v1421 = vshrl.u32 %v1279, 16
        %v1423 = vrot.slane %v1421, 4
        %v1424 = vor.u32 %v1423, %v1419
        %v1425 = vrot.slane %v1424, 4
        %v1427 = vshll.u32 %v1280, 16
        %v1429 = vrot.slane %v1427, 5
        %v1430 = vsel %vm259, %v1425, %v1429
        %v1432 = vshrl.u32 %v1281, 16
        %v1434 = vrot.slane %v1432, 4
        %v1435 = vshll.u32 %v1281, 16
        %v1437 = vrot.slane %v1435, 5
        %v1438 = vor.u32 %v1434, %v1437
        %v1439 = vrot.slane %v1438, 4
        %v1441 = vshll.u32 %v1282, 16
        %v1443 = vrot.slane %v1441, 5
        %v1444 = vsel %vm259, %v1439, %v1443
        %v1445 = vshrl.u32 %v1282, 16
        %v1447 = vrot.slane %v1445, 4
        %v1448 = vor.u32 %v1447, %v1443
        %v1449 = vrot.slane %v1448, 4
        %v1451 = vshll.u32 %v1283, 16
        %v1453 = vrot.slane %v1451, 5
        %v1454 = vsel %vm259, %v1449, %v1453
        %v1456 = vshrl.u32 %v1284, 16
        %v1458 = vrot.slane %v1456, 4
        %v1459 = vshll.u32 %v1284, 16
        %v1461 = vrot.slane %v1459, 5
        %v1462 = vor.u32 %v1458, %v1461
        %v1463 = vrot.slane %v1462, 4
        %v1465 = vshll.u32 %v1285, 16
        %v1467 = vrot.slane %v1465, 5
        %v1468 = vsel %vm259, %v1463, %v1467
        %v1469 = vshrl.u32 %v1285, 16
        %v1471 = vrot.slane %v1469, 4
        %v1472 = vor.u32 %v1471, %v1467
        %v1473 = vrot.slane %v1472, 4
        %v1475 = vshll.u32 %v1286, 16
        %v1477 = vrot.slane %v1475, 5
        %v1478 = vsel %vm259, %v1473, %v1477
        %s1479 = scalar_lea.vmem %s219, 64
        %v1480 = vld [vmem:[%s1479] sm:$0xf]
        %v1481 = vld [vmem:[%s1479 + $0x4] sm:$0xf]
        %v1482 = vld [vmem:[%s1479 + $0x8] sm:$0xf]
        %v1483 = vld [vmem:[%s1479 + $0xc] sm:$0xf]
        %v1484 = vunpack.c.l.b16 %v1300
        %v1485 = vunpack.c.l.b16 %v1310
        %v1486 = vunpack.c.l.b16 %v1324
        %v1487 = vunpack.c.l.b16 %v1334
        %v1488 = vunpack.c.l.b16 %v1348
        %v1489 = vunpack.c.l.b16 %v1358
        %v1490 = vunpack.c.l.b16 %v1372
        %v1491 = vunpack.c.l.b16 %v1382
        %v1492 = vunpack.c.l.b16 %v1396
        %v1493 = vunpack.c.l.b16 %v1406
        %v1494 = vunpack.c.l.b16 %v1420
        %v1495 = vunpack.c.l.b16 %v1430
        %v1496 = vunpack.c.l.b16 %v1444
        %v1497 = vunpack.c.l.b16 %v1454
        %v1498 = vunpack.c.l.b16 %v1468
        %v1499 = vunpack.c.l.b16 %v1478
        %v1500 = vpack.c.b16 %v1485, %v1484
        %v1501 = vpack.c.b16 %v1487, %v1486
        %v1502 = vpack.c.b16 %v1489, %v1488
        %v1503 = vpack.c.b16 %v1491, %v1490
        %v1504 = vpack.c.b16 %v1493, %v1492
        %v1505 = vpack.c.b16 %v1495, %v1494
        %v1506 = vpack.c.b16 %v1497, %v1496
        %v1507 = vpack.c.b16 %v1499, %v1498
        %v1512 = vunpack.c.l.b16 %v1480
        %v1513 = vunpack.c.l.b16 %v1481
        %v1514 = vunpack.c.l.b16 %v1482
        %v1515 = vunpack.c.l.b16 %v1483
        %v1516 = vpack.c.b16 %v1513, %v1512
        %v1517 = vpack.c.b16 %v1515, %v1514
        %v1521 = vsel %vm493, %v1500, 0
        %v1524 = vsel %vm493, %v1501, 0
        %v1527 = vsel %vm493, %v1502, 0
        %v1530 = vsel %vm493, %v1503, 0
        %v1533 = vsel %vm493, %v1504, 0
        %v1536 = vsel %vm493, %v1505, 0
        %v1539 = vsel %vm493, %v1506, 0
        %v1542 = vsel %vm493, %v1507, 0
        %1544 = vmatprep.subr.bf16.mxu0 0
        %1545 = vmatpush1.bf16.msra.mxu0 0
        %1546 = vmatprep.subr.bf16.mxu0 0
        %1547 = vmatpush1.bf16.msra.mxu0 0
        %1548 = vmatprep.subr.bf16.mxu0 0
        %1549 = vmatpush1.bf16.msra.mxu0 0
        %1550 = vmatprep.subr.bf16.mxu0 0
        %1551 = vmatpush1.bf16.msra.mxu0 0
        %1552 = vmatprep.subr.bf16.mxu0 0
        %1553 = vmatpush1.bf16.msra.mxu0 0
        %1554 = vmatprep.subr.bf16.mxu0 0
        %1555 = vmatpush1.bf16.msra.mxu0 0
        %1556 = vmatprep.subr.bf16.mxu0 0
        %1557 = vmatpush1.bf16.msra.mxu0 %v1517
        %1558 = vmatprep.subr.bf16.mxu0 0
        %1559 = vmatpush1.bf16.msra.mxu0 %v1516
        %1560 = vmatprep.subr.bf16.mxu0 0
        %1561 = vmatpush2.bf16.msra.mxu0 0
        %1562 = vmatprep.subr.bf16.mxu0 0
        %1563 = vmatpush2.bf16.msra.mxu0 0
        %1564 = vmatprep.subr.bf16.mxu0 0
        %1565 = vmatpush2.bf16.msra.mxu0 0
        %1566 = vmatprep.subr.bf16.mxu0 0
        %1567 = vmatpush2.bf16.msra.mxu0 0
        %1568 = vmatprep.subr.bf16.mxu0 0
        %1569 = vmatpush2.bf16.msra.mxu0 0
        %1570 = vmatprep.subr.bf16.mxu0 0
        %1571 = vmatpush2.bf16.msra.mxu0 0
        %1572 = vmatprep.subr.bf16.mxu0 0
        %1573 = vmatpush2.bf16.msra.mxu0 0
        %1574 = vmatprep.subr.bf16.mxu0 0
        %1575 = vmatpush2.bf16.msra.mxu0 0
        %1576 = vmatprep.mubr.bf16.mxu0 0
        %1577 = vmatmul.mubr.bf16.gmra.mxu0 %v1521
        %v1578 = vpop.f32.mrf.mxu0
        %v1579 = vadd.f32 0.0, %v1578
        %v1580 = vpop.f32.mrf.mxu0
        %v1581 = vpop.f32.mrf.mxu0
        %v1582 = vadd.f32 0.0, %v1581
        %v1583 = vpop.f32.mrf.mxu0
        %1584 = vmatprep.mubr.bf16.mxu0 0
        %1585 = vmatmul.mubr.bf16.gmra.mxu0 %v1524
        %v1586 = vpop.f32.mrf.mxu0
        %v1587 = vadd.f32 0.0, %v1586
        %v1588 = vpop.f32.mrf.mxu0
        %v1589 = vpop.f32.mrf.mxu0
        %v1590 = vadd.f32 0.0, %v1589
        %v1591 = vpop.f32.mrf.mxu0
        %1592 = vmatprep.mubr.bf16.mxu0 0
        %1593 = vmatmul.mubr.bf16.gmra.mxu0 %v1527
        %v1594 = vpop.f32.mrf.mxu0
        %v1595 = vadd.f32 0.0, %v1594
        %v1596 = vpop.f32.mrf.mxu0
        %v1597 = vpop.f32.mrf.mxu0
        %v1598 = vadd.f32 0.0, %v1597
        %v1599 = vpop.f32.mrf.mxu0
        %1600 = vmatprep.mubr.bf16.mxu0 0
        %1601 = vmatmul.mubr.bf16.gmra.mxu0 %v1530
        %v1602 = vpop.f32.mrf.mxu0
        %v1603 = vadd.f32 0.0, %v1602
        %v1604 = vpop.f32.mrf.mxu0
        %v1605 = vpop.f32.mrf.mxu0
        %v1606 = vadd.f32 0.0, %v1605
        %v1607 = vpop.f32.mrf.mxu0
        %1608 = vmatprep.mubr.bf16.mxu0 0
        %1609 = vmatmul.mubr.bf16.gmra.mxu0 %v1533
        %v1610 = vpop.f32.mrf.mxu0
        %v1611 = vadd.f32 0.0, %v1610
        %v1612 = vpop.f32.mrf.mxu0
        %v1613 = vpop.f32.mrf.mxu0
        %v1614 = vadd.f32 0.0, %v1613
        %v1615 = vpop.f32.mrf.mxu0
        %1616 = vmatprep.mubr.bf16.mxu0 0
        %1617 = vmatmul.mubr.bf16.gmra.mxu0 %v1536
        %v1618 = vpop.f32.mrf.mxu0
        %v1619 = vadd.f32 0.0, %v1618
        %v1620 = vpop.f32.mrf.mxu0
        %v1621 = vpop.f32.mrf.mxu0
        %v1622 = vadd.f32 0.0, %v1621
        %v1623 = vpop.f32.mrf.mxu0
        %1624 = vmatprep.mubr.bf16.mxu0 0
        %1625 = vmatmul.mubr.bf16.gmra.mxu0 %v1539
        %v1626 = vpop.f32.mrf.mxu0
        %v1627 = vadd.f32 0.0, %v1626
        %v1628 = vpop.f32.mrf.mxu0
        %v1629 = vpop.f32.mrf.mxu0
        %v1630 = vadd.f32 0.0, %v1629
        %v1631 = vpop.f32.mrf.mxu0
        %1632 = vmatprep.mubr.bf16.mxu0 0
        %1633 = vmatmul.mubr.bf16.gmra.mxu0 %v1542
        %v1634 = vpop.f32.mrf.mxu0
        %v1635 = vadd.f32 0.0, %v1634
        %v1636 = vpop.f32.mrf.mxu0
        %v1637 = vpop.f32.mrf.mxu0
        %v1638 = vadd.f32 0.0, %v1637
        %v1639 = vpop.f32.mrf.mxu0
        %1640 = vdwg.mxu0
        %v1641 = vadd.f32 %v1247, %v1579
        %v1642 = vadd.f32 %v1248, %v1582
        %v1643 = vadd.f32 %v1249, %v1587
        %v1644 = vadd.f32 %v1250, %v1590
        %v1645 = vadd.f32 %v1251, %v1595
        %v1646 = vadd.f32 %v1252, %v1598
        %v1647 = vadd.f32 %v1253, %v1603
        %v1648 = vadd.f32 %v1254, %v1606
        %v1649 = vadd.f32 %v1255, %v1611
        %v1650 = vadd.f32 %v1256, %v1614
        %v1651 = vadd.f32 %v1257, %v1619
        %v1652 = vadd.f32 %v1258, %v1622
        %v1653 = vadd.f32 %v1259, %v1627
        %v1654 = vadd.f32 %v1260, %v1630
        %v1655 = vadd.f32 %v1261, %v1635
        %v1656 = vadd.f32 %v1262, %v1638
        %v1657 = vld [vmem:[%s1052] sm:$0xe]
        %v1658 = vld [vmem:[%s1052 + $0xc] sm:$0xe]
        %v1659 = vld [vmem:[%s1052 + $0x18] sm:$0xe]
        %v1660 = vld [vmem:[%s1052 + $0x24] sm:$0xe]
        %v1661 = vld [vmem:[%s1052 + $0x30] sm:$0xe]
        %v1662 = vld [vmem:[%s1052 + $0x3c] sm:$0xe]
        %v1663 = vld [vmem:[%s1052 + $0x48] sm:$0xe]
        %v1664 = vld [vmem:[%s1052 + $0x54] sm:$0xe]
        %v1689 = vrot.slane %v1657, 5
        %v1690 = vrot.slane %v1689, 4
        %v1691 = vrot.slane %v1264, 5
        %v1692 = vsel %vm814, %v1690, %v1691
        %v1693 = vrot.slane %v1691, 4
        %v1694 = vrot.slane %v1265, 5
        %v1695 = vsel %vm814, %v1693, %v1694
        %v1696 = vrot.slane %v1658, 5
        %v1697 = vrot.slane %v1696, 4
        %v1698 = vrot.slane %v1267, 5
        %v1699 = vsel %vm814, %v1697, %v1698
        %v1700 = vrot.slane %v1698, 4
        %v1701 = vrot.slane %v1268, 5
        %v1702 = vsel %vm814, %v1700, %v1701
        %v1703 = vrot.slane %v1659, 5
        %v1704 = vrot.slane %v1703, 4
        %v1705 = vrot.slane %v1270, 5
        %v1706 = vsel %vm814, %v1704, %v1705
        %v1707 = vrot.slane %v1705, 4
        %v1708 = vrot.slane %v1271, 5
        %v1709 = vsel %vm814, %v1707, %v1708
        %v1710 = vrot.slane %v1660, 5
        %v1711 = vrot.slane %v1710, 4
        %v1712 = vrot.slane %v1273, 5
        %v1713 = vsel %vm814, %v1711, %v1712
        %v1714 = vrot.slane %v1712, 4
        %v1715 = vrot.slane %v1274, 5
        %v1716 = vsel %vm814, %v1714, %v1715
        %v1717 = vrot.slane %v1661, 5
        %v1718 = vrot.slane %v1717, 4
        %v1719 = vrot.slane %v1276, 5
        %v1720 = vsel %vm814, %v1718, %v1719
        %v1721 = vrot.slane %v1719, 4
        %v1722 = vrot.slane %v1277, 5
        %v1723 = vsel %vm814, %v1721, %v1722
        %v1724 = vrot.slane %v1662, 5
        %v1725 = vrot.slane %v1724, 4
        %v1726 = vrot.slane %v1279, 5
        %v1727 = vsel %vm814, %v1725, %v1726
        %v1728 = vrot.slane %v1726, 4
        %v1729 = vrot.slane %v1280, 5
        %v1730 = vsel %vm814, %v1728, %v1729
        %v1731 = vrot.slane %v1663, 5
        %v1732 = vrot.slane %v1731, 4
        %v1733 = vrot.slane %v1282, 5
        %v1734 = vsel %vm814, %v1732, %v1733
        %v1735 = vrot.slane %v1733, 4
        %v1736 = vrot.slane %v1283, 5
        %v1737 = vsel %vm814, %v1735, %v1736
        %v1738 = vrot.slane %v1664, 5
        %v1739 = vrot.slane %v1738, 4
        %v1740 = vrot.slane %v1285, 5
        %v1741 = vsel %vm814, %v1739, %v1740
        %v1742 = vrot.slane %v1740, 4
        %v1743 = vrot.slane %v1286, 5
        %v1744 = vsel %vm814, %v1742, %v1743
        %s1745 = scalar_lea.vmem %s219, 80
        %v1746 = vld [vmem:[%s1745] sm:$0xf]
        %v1747 = vld [vmem:[%s1745 + $0x4] sm:$0xf]
        %v1748 = vld [vmem:[%s1745 + $0x8] sm:$0xf]
        %v1749 = vld [vmem:[%s1745 + $0xc] sm:$0xf]
        %v1750 = vunpack.c.l.b16 %v1692
        %v1751 = vunpack.c.l.b16 %v1695
        %v1752 = vunpack.c.l.b16 %v1699
        %v1753 = vunpack.c.l.b16 %v1702
        %v1754 = vunpack.c.l.b16 %v1706
        %v1755 = vunpack.c.l.b16 %v1709
        %v1756 = vunpack.c.l.b16 %v1713
        %v1757 = vunpack.c.l.b16 %v1716
        %v1758 = vunpack.c.l.b16 %v1720
        %v1759 = vunpack.c.l.b16 %v1723
        %v1760 = vunpack.c.l.b16 %v1727
        %v1761 = vunpack.c.l.b16 %v1730
        %v1762 = vunpack.c.l.b16 %v1734
        %v1763 = vunpack.c.l.b16 %v1737
        %v1764 = vunpack.c.l.b16 %v1741
        %v1765 = vunpack.c.l.b16 %v1744
        %v1766 = vpack.c.b16 %v1751, %v1750
        %v1767 = vpack.c.b16 %v1753, %v1752
        %v1768 = vpack.c.b16 %v1755, %v1754
        %v1769 = vpack.c.b16 %v1757, %v1756
        %v1770 = vpack.c.b16 %v1759, %v1758
        %v1771 = vpack.c.b16 %v1761, %v1760
        %v1772 = vpack.c.b16 %v1763, %v1762
        %v1773 = vpack.c.b16 %v1765, %v1764
        %v1778 = vunpack.c.l.b16 %v1746
        %v1779 = vunpack.c.l.b16 %v1747
        %v1780 = vunpack.c.l.b16 %v1748
        %v1781 = vunpack.c.l.b16 %v1749
        %v1782 = vpack.c.b16 %v1779, %v1778
        %v1783 = vpack.c.b16 %v1781, %v1780
        %v1787 = vsel %vm493, %v1766, 0
        %v1790 = vsel %vm493, %v1767, 0
        %v1793 = vsel %vm493, %v1768, 0
        %v1796 = vsel %vm493, %v1769, 0
        %v1799 = vsel %vm493, %v1770, 0
        %v1802 = vsel %vm493, %v1771, 0
        %v1805 = vsel %vm493, %v1772, 0
        %v1808 = vsel %vm493, %v1773, 0
        %1810 = vmatprep.subr.bf16.mxu0 0
        %1811 = vmatpush1.bf16.msra.mxu0 0
        %1812 = vmatprep.subr.bf16.mxu0 0
        %1813 = vmatpush1.bf16.msra.mxu0 0
        %1814 = vmatprep.subr.bf16.mxu0 0
        %1815 = vmatpush1.bf16.msra.mxu0 0
        %1816 = vmatprep.subr.bf16.mxu0 0
        %1817 = vmatpush1.bf16.msra.mxu0 0
        %1818 = vmatprep.subr.bf16.mxu0 0
        %1819 = vmatpush1.bf16.msra.mxu0 0
        %1820 = vmatprep.subr.bf16.mxu0 0
        %1821 = vmatpush1.bf16.msra.mxu0 0
        %1822 = vmatprep.subr.bf16.mxu0 0
        %1823 = vmatpush1.bf16.msra.mxu0 %v1783
        %1824 = vmatprep.subr.bf16.mxu0 0
        %1825 = vmatpush1.bf16.msra.mxu0 %v1782
        %1826 = vmatprep.subr.bf16.mxu0 0
        %1827 = vmatpush2.bf16.msra.mxu0 0
        %1828 = vmatprep.subr.bf16.mxu0 0
        %1829 = vmatpush2.bf16.msra.mxu0 0
        %1830 = vmatprep.subr.bf16.mxu0 0
        %1831 = vmatpush2.bf16.msra.mxu0 0
        %1832 = vmatprep.subr.bf16.mxu0 0
        %1833 = vmatpush2.bf16.msra.mxu0 0
        %1834 = vmatprep.subr.bf16.mxu0 0
        %1835 = vmatpush2.bf16.msra.mxu0 0
        %1836 = vmatprep.subr.bf16.mxu0 0
        %1837 = vmatpush2.bf16.msra.mxu0 0
        %1838 = vmatprep.subr.bf16.mxu0 0
        %1839 = vmatpush2.bf16.msra.mxu0 0
        %1840 = vmatprep.subr.bf16.mxu0 0
        %1841 = vmatpush2.bf16.msra.mxu0 0
        %1842 = vmatprep.mubr.bf16.mxu0 0
        %1843 = vmatmul.mubr.bf16.gmra.mxu0 %v1787
        %v1844 = vpop.f32.mrf.mxu0
        %v1845 = vadd.f32 0.0, %v1844
        %v1846 = vpop.f32.mrf.mxu0
        %v1847 = vpop.f32.mrf.mxu0
        %v1848 = vadd.f32 0.0, %v1847
        %v1849 = vpop.f32.mrf.mxu0
        %1850 = vmatprep.mubr.bf16.mxu0 0
        %1851 = vmatmul.mubr.bf16.gmra.mxu0 %v1790
        %v1852 = vpop.f32.mrf.mxu0
        %v1853 = vadd.f32 0.0, %v1852
        %v1854 = vpop.f32.mrf.mxu0
        %v1855 = vpop.f32.mrf.mxu0
        %v1856 = vadd.f32 0.0, %v1855
        %v1857 = vpop.f32.mrf.mxu0
        %1858 = vmatprep.mubr.bf16.mxu0 0
        %1859 = vmatmul.mubr.bf16.gmra.mxu0 %v1793
        %v1860 = vpop.f32.mrf.mxu0
        %v1861 = vadd.f32 0.0, %v1860
        %v1862 = vpop.f32.mrf.mxu0
        %v1863 = vpop.f32.mrf.mxu0
        %v1864 = vadd.f32 0.0, %v1863
        %v1865 = vpop.f32.mrf.mxu0
        %1866 = vmatprep.mubr.bf16.mxu0 0
        %1867 = vmatmul.mubr.bf16.gmra.mxu0 %v1796
        %v1868 = vpop.f32.mrf.mxu0
        %v1869 = vadd.f32 0.0, %v1868
        %v1870 = vpop.f32.mrf.mxu0
        %v1871 = vpop.f32.mrf.mxu0
        %v1872 = vadd.f32 0.0, %v1871
        %v1873 = vpop.f32.mrf.mxu0
        %1874 = vmatprep.mubr.bf16.mxu0 0
        %1875 = vmatmul.mubr.bf16.gmra.mxu0 %v1799
        %v1876 = vpop.f32.mrf.mxu0
        %v1877 = vadd.f32 0.0, %v1876
        %v1878 = vpop.f32.mrf.mxu0
        %v1879 = vpop.f32.mrf.mxu0
        %v1880 = vadd.f32 0.0, %v1879
        %v1881 = vpop.f32.mrf.mxu0
        %1882 = vmatprep.mubr.bf16.mxu0 0
        %1883 = vmatmul.mubr.bf16.gmra.mxu0 %v1802
        %v1884 = vpop.f32.mrf.mxu0
        %v1885 = vadd.f32 0.0, %v1884
        %v1886 = vpop.f32.mrf.mxu0
        %v1887 = vpop.f32.mrf.mxu0
        %v1888 = vadd.f32 0.0, %v1887
        %v1889 = vpop.f32.mrf.mxu0
        %1890 = vmatprep.mubr.bf16.mxu0 0
        %1891 = vmatmul.mubr.bf16.gmra.mxu0 %v1805
        %v1892 = vpop.f32.mrf.mxu0
        %v1893 = vadd.f32 0.0, %v1892
        %v1894 = vpop.f32.mrf.mxu0
        %v1895 = vpop.f32.mrf.mxu0
        %v1896 = vadd.f32 0.0, %v1895
        %v1897 = vpop.f32.mrf.mxu0
        %1898 = vmatprep.mubr.bf16.mxu0 0
        %1899 = vmatmul.mubr.bf16.gmra.mxu0 %v1808
        %v1900 = vpop.f32.mrf.mxu0
        %v1901 = vadd.f32 0.0, %v1900
        %v1902 = vpop.f32.mrf.mxu0
        %v1903 = vpop.f32.mrf.mxu0
        %v1904 = vadd.f32 0.0, %v1903
        %v1905 = vpop.f32.mrf.mxu0
        %1906 = vdwg.mxu0
        %v1907 = vadd.f32 %v1641, %v1845
        %v1908 = vadd.f32 %v1642, %v1848
        %v1909 = vadd.f32 %v1643, %v1853
        %v1910 = vadd.f32 %v1644, %v1856
        %v1911 = vadd.f32 %v1645, %v1861
        %v1912 = vadd.f32 %v1646, %v1864
        %v1913 = vadd.f32 %v1647, %v1869
        %v1914 = vadd.f32 %v1648, %v1872
        %v1915 = vadd.f32 %v1649, %v1877
        %v1916 = vadd.f32 %v1650, %v1880
        %v1917 = vadd.f32 %v1651, %v1885
        %v1918 = vadd.f32 %v1652, %v1888
        %v1919 = vadd.f32 %v1653, %v1893
        %v1920 = vadd.f32 %v1654, %v1896
        %v1921 = vadd.f32 %v1655, %v1901
        %v1922 = vadd.f32 %v1656, %v1904
        %s1923 = sadd.s32 %s225, 2
        %s1924 = smul.u32 %s1923, 3
        %s1925 = smul.addr %s1924, 4
        %s1926 = scalar_lea.vmem %s215, %s1925
        %v1927 = vld [vmem:[%s1926] sm:$0xf]
        %v1928 = vld [vmem:[%s1926 + $0x4] sm:$0xf]
        %v1929 = vld [vmem:[%s1926 + $0xc] sm:$0xf]
        %v1930 = vld [vmem:[%s1926 + $0x10] sm:$0xf]
        %v1931 = vld [vmem:[%s1926 + $0x18] sm:$0xf]
        %v1932 = vld [vmem:[%s1926 + $0x1c] sm:$0xf]
        %v1933 = vld [vmem:[%s1926 + $0x24] sm:$0xf]
        %v1934 = vld [vmem:[%s1926 + $0x28] sm:$0xf]
        %v1935 = vld [vmem:[%s1926 + $0x30] sm:$0xf]
        %v1936 = vld [vmem:[%s1926 + $0x34] sm:$0xf]
        %v1937 = vld [vmem:[%s1926 + $0x3c] sm:$0xf]
        %v1938 = vld [vmem:[%s1926 + $0x40] sm:$0xf]
        %v1939 = vld [vmem:[%s1926 + $0x48] sm:$0xf]
        %v1940 = vld [vmem:[%s1926 + $0x4c] sm:$0xf]
        %v1941 = vld [vmem:[%s1926 + $0x54] sm:$0xf]
        %v1942 = vld [vmem:[%s1926 + $0x58] sm:$0xf]
        %s1943 = scalar_lea.vmem %s219, 96
        %v1944 = vld [vmem:[%s1943] sm:$0xf]
        %v1945 = vld [vmem:[%s1943 + $0x4] sm:$0xf]
        %v1946 = vld [vmem:[%s1943 + $0x8] sm:$0xf]
        %v1947 = vld [vmem:[%s1943 + $0xc] sm:$0xf]
        %v1964 = vunpack.c.l.b16 %v1927
        %v1965 = vunpack.c.l.b16 %v1928
        %v1966 = vunpack.c.l.b16 %v1929
        %v1967 = vunpack.c.l.b16 %v1930
        %v1968 = vunpack.c.l.b16 %v1931
        %v1969 = vunpack.c.l.b16 %v1932
        %v1970 = vunpack.c.l.b16 %v1933
        %v1971 = vunpack.c.l.b16 %v1934
        %v1972 = vunpack.c.l.b16 %v1935
        %v1973 = vunpack.c.l.b16 %v1936
        %v1974 = vunpack.c.l.b16 %v1937
        %v1975 = vunpack.c.l.b16 %v1938
        %v1976 = vunpack.c.l.b16 %v1939
        %v1977 = vunpack.c.l.b16 %v1940
        %v1978 = vunpack.c.l.b16 %v1941
        %v1979 = vunpack.c.l.b16 %v1942
        %v1980 = vpack.c.b16 %v1965, %v1964
        %v1981 = vpack.c.b16 %v1967, %v1966
        %v1982 = vpack.c.b16 %v1969, %v1968
        %v1983 = vpack.c.b16 %v1971, %v1970
        %v1984 = vpack.c.b16 %v1973, %v1972
        %v1985 = vpack.c.b16 %v1975, %v1974
        %v1986 = vpack.c.b16 %v1977, %v1976
        %v1987 = vpack.c.b16 %v1979, %v1978
        %v1992 = vunpack.c.l.b16 %v1944
        %v1993 = vunpack.c.l.b16 %v1945
        %v1994 = vunpack.c.l.b16 %v1946
        %v1995 = vunpack.c.l.b16 %v1947
        %v1996 = vpack.c.b16 %v1993, %v1992
        %v1997 = vpack.c.b16 %v1995, %v1994
        %v2001 = vsel %vm493, %v1980, 0
        %v2004 = vsel %vm493, %v1981, 0
        %v2007 = vsel %vm493, %v1982, 0
        %v2010 = vsel %vm493, %v1983, 0
        %v2013 = vsel %vm493, %v1984, 0
        %v2016 = vsel %vm493, %v1985, 0
        %v2019 = vsel %vm493, %v1986, 0
        %v2022 = vsel %vm493, %v1987, 0
        %2024 = vmatprep.subr.bf16.mxu0 0
        %2025 = vmatpush1.bf16.msra.mxu0 0
        %2026 = vmatprep.subr.bf16.mxu0 0
        %2027 = vmatpush1.bf16.msra.mxu0 0
        %2028 = vmatprep.subr.bf16.mxu0 0
        %2029 = vmatpush1.bf16.msra.mxu0 0
        %2030 = vmatprep.subr.bf16.mxu0 0
        %2031 = vmatpush1.bf16.msra.mxu0 0
        %2032 = vmatprep.subr.bf16.mxu0 0
        %2033 = vmatpush1.bf16.msra.mxu0 0
        %2034 = vmatprep.subr.bf16.mxu0 0
        %2035 = vmatpush1.bf16.msra.mxu0 0
        %2036 = vmatprep.subr.bf16.mxu0 0
        %2037 = vmatpush1.bf16.msra.mxu0 %v1997
        %2038 = vmatprep.subr.bf16.mxu0 0
        %2039 = vmatpush1.bf16.msra.mxu0 %v1996
        %2040 = vmatprep.subr.bf16.mxu0 0
        %2041 = vmatpush2.bf16.msra.mxu0 0
        %2042 = vmatprep.subr.bf16.mxu0 0
        %2043 = vmatpush2.bf16.msra.mxu0 0
        %2044 = vmatprep.subr.bf16.mxu0 0
        %2045 = vmatpush2.bf16.msra.mxu0 0
        %2046 = vmatprep.subr.bf16.mxu0 0
        %2047 = vmatpush2.bf16.msra.mxu0 0
        %2048 = vmatprep.subr.bf16.mxu0 0
        %2049 = vmatpush2.bf16.msra.mxu0 0
        %2050 = vmatprep.subr.bf16.mxu0 0
        %2051 = vmatpush2.bf16.msra.mxu0 0
        %2052 = vmatprep.subr.bf16.mxu0 0
        %2053 = vmatpush2.bf16.msra.mxu0 0
        %2054 = vmatprep.subr.bf16.mxu0 0
        %2055 = vmatpush2.bf16.msra.mxu0 0
        %2056 = vmatprep.mubr.bf16.mxu0 0
        %2057 = vmatmul.mubr.bf16.gmra.mxu0 %v2001
        %v2058 = vpop.f32.mrf.mxu0
        %v2059 = vadd.f32 0.0, %v2058
        %v2060 = vpop.f32.mrf.mxu0
        %v2061 = vpop.f32.mrf.mxu0
        %v2062 = vadd.f32 0.0, %v2061
        %v2063 = vpop.f32.mrf.mxu0
        %2064 = vmatprep.mubr.bf16.mxu0 0
        %2065 = vmatmul.mubr.bf16.gmra.mxu0 %v2004
        %v2066 = vpop.f32.mrf.mxu0
        %v2067 = vadd.f32 0.0, %v2066
        %v2068 = vpop.f32.mrf.mxu0
        %v2069 = vpop.f32.mrf.mxu0
        %v2070 = vadd.f32 0.0, %v2069
        %v2071 = vpop.f32.mrf.mxu0
        %2072 = vmatprep.mubr.bf16.mxu0 0
        %2073 = vmatmul.mubr.bf16.gmra.mxu0 %v2007
        %v2074 = vpop.f32.mrf.mxu0
        %v2075 = vadd.f32 0.0, %v2074
        %v2076 = vpop.f32.mrf.mxu0
        %v2077 = vpop.f32.mrf.mxu0
        %v2078 = vadd.f32 0.0, %v2077
        %v2079 = vpop.f32.mrf.mxu0
        %2080 = vmatprep.mubr.bf16.mxu0 0
        %2081 = vmatmul.mubr.bf16.gmra.mxu0 %v2010
        %v2082 = vpop.f32.mrf.mxu0
        %v2083 = vadd.f32 0.0, %v2082
        %v2084 = vpop.f32.mrf.mxu0
        %v2085 = vpop.f32.mrf.mxu0
        %v2086 = vadd.f32 0.0, %v2085
        %v2087 = vpop.f32.mrf.mxu0
        %2088 = vmatprep.mubr.bf16.mxu0 0
        %2089 = vmatmul.mubr.bf16.gmra.mxu0 %v2013
        %v2090 = vpop.f32.mrf.mxu0
        %v2091 = vadd.f32 0.0, %v2090
        %v2092 = vpop.f32.mrf.mxu0
        %v2093 = vpop.f32.mrf.mxu0
        %v2094 = vadd.f32 0.0, %v2093
        %v2095 = vpop.f32.mrf.mxu0
        %2096 = vmatprep.mubr.bf16.mxu0 0
        %2097 = vmatmul.mubr.bf16.gmra.mxu0 %v2016
        %v2098 = vpop.f32.mrf.mxu0
        %v2099 = vadd.f32 0.0, %v2098
        %v2100 = vpop.f32.mrf.mxu0
        %v2101 = vpop.f32.mrf.mxu0
        %v2102 = vadd.f32 0.0, %v2101
        %v2103 = vpop.f32.mrf.mxu0
        %2104 = vmatprep.mubr.bf16.mxu0 0
        %2105 = vmatmul.mubr.bf16.gmra.mxu0 %v2019
        %v2106 = vpop.f32.mrf.mxu0
        %v2107 = vadd.f32 0.0, %v2106
        %v2108 = vpop.f32.mrf.mxu0
        %v2109 = vpop.f32.mrf.mxu0
        %v2110 = vadd.f32 0.0, %v2109
        %v2111 = vpop.f32.mrf.mxu0
        %2112 = vmatprep.mubr.bf16.mxu0 0
        %2113 = vmatmul.mubr.bf16.gmra.mxu0 %v2022
        %v2114 = vpop.f32.mrf.mxu0
        %v2115 = vadd.f32 0.0, %v2114
        %v2116 = vpop.f32.mrf.mxu0
        %v2117 = vpop.f32.mrf.mxu0
        %v2118 = vadd.f32 0.0, %v2117
        %v2119 = vpop.f32.mrf.mxu0
        %2120 = vdwg.mxu0
        %v2121 = vadd.f32 %v1907, %v2059
        %v2122 = vadd.f32 %v1908, %v2062
        %v2123 = vadd.f32 %v1909, %v2067
        %v2124 = vadd.f32 %v1910, %v2070
        %v2125 = vadd.f32 %v1911, %v2075
        %v2126 = vadd.f32 %v1912, %v2078
        %v2127 = vadd.f32 %v1913, %v2083
        %v2128 = vadd.f32 %v1914, %v2086
        %v2129 = vadd.f32 %v1915, %v2091
        %v2130 = vadd.f32 %v1916, %v2094
        %v2131 = vadd.f32 %v1917, %v2099
        %v2132 = vadd.f32 %v1918, %v2102
        %v2133 = vadd.f32 %v1919, %v2107
        %v2134 = vadd.f32 %v1920, %v2110
        %v2135 = vadd.f32 %v1921, %v2115
        %v2136 = vadd.f32 %v1922, %v2118
        %v2137 = vld [vmem:[%s1926] sm:$0xf]
        %v2138 = vld [vmem:[%s1926 + $0x4] sm:$0xf]
        %v2139 = vld [vmem:[%s1926 + $0x8] sm:$0x1]
        %v2140 = vld [vmem:[%s1926 + $0xc] sm:$0xf]
        %v2141 = vld [vmem:[%s1926 + $0x10] sm:$0xf]
        %v2142 = vld [vmem:[%s1926 + $0x14] sm:$0x1]
        %v2143 = vld [vmem:[%s1926 + $0x18] sm:$0xf]
        %v2144 = vld [vmem:[%s1926 + $0x1c] sm:$0xf]
        %v2145 = vld [vmem:[%s1926 + $0x20] sm:$0x1]
        %v2146 = vld [vmem:[%s1926 + $0x24] sm:$0xf]
        %v2147 = vld [vmem:[%s1926 + $0x28] sm:$0xf]
        %v2148 = vld [vmem:[%s1926 + $0x2c] sm:$0x1]
        %v2149 = vld [vmem:[%s1926 + $0x30] sm:$0xf]
        %v2150 = vld [vmem:[%s1926 + $0x34] sm:$0xf]
        %v2151 = vld [vmem:[%s1926 + $0x38] sm:$0x1]
        %v2152 = vld [vmem:[%s1926 + $0x3c] sm:$0xf]
        %v2153 = vld [vmem:[%s1926 + $0x40] sm:$0xf]
        %v2154 = vld [vmem:[%s1926 + $0x44] sm:$0x1]
        %v2155 = vld [vmem:[%s1926 + $0x48] sm:$0xf]
        %v2156 = vld [vmem:[%s1926 + $0x4c] sm:$0xf]
        %v2157 = vld [vmem:[%s1926 + $0x50] sm:$0x1]
        %v2158 = vld [vmem:[%s1926 + $0x54] sm:$0xf]
        %v2159 = vld [vmem:[%s1926 + $0x58] sm:$0xf]
        %v2160 = vld [vmem:[%s1926 + $0x5c] sm:$0x1]
        %v2162 = vshrl.u32 %v2137, 16
        %v2164 = vrot.slane %v2162, 4
        %v2165 = vshll.u32 %v2137, 16
        %v2167 = vrot.slane %v2165, 5
        %v2168 = vor.u32 %v2164, %v2167
        %v2169 = vrot.slane %v2168, 4
        %v2171 = vshll.u32 %v2138, 16
        %v2173 = vrot.slane %v2171, 5
        %v2174 = vsel %vm259, %v2169, %v2173
        %v2175 = vshrl.u32 %v2138, 16
        %v2177 = vrot.slane %v2175, 4
        %v2178 = vor.u32 %v2177, %v2173
        %v2179 = vrot.slane %v2178, 4
        %v2181 = vshll.u32 %v2139, 16
        %v2183 = vrot.slane %v2181, 5
        %v2184 = vsel %vm259, %v2179, %v2183
        %v2186 = vshrl.u32 %v2140, 16
        %v2188 = vrot.slane %v2186, 4
        %v2189 = vshll.u32 %v2140, 16
        %v2191 = vrot.slane %v2189, 5
        %v2192 = vor.u32 %v2188, %v2191
        %v2193 = vrot.slane %v2192, 4
        %v2195 = vshll.u32 %v2141, 16
        %v2197 = vrot.slane %v2195, 5
        %v2198 = vsel %vm259, %v2193, %v2197
        %v2199 = vshrl.u32 %v2141, 16
        %v2201 = vrot.slane %v2199, 4
        %v2202 = vor.u32 %v2201, %v2197
        %v2203 = vrot.slane %v2202, 4
        %v2205 = vshll.u32 %v2142, 16
        %v2207 = vrot.slane %v2205, 5
        %v2208 = vsel %vm259, %v2203, %v2207
        %v2210 = vshrl.u32 %v2143, 16
        %v2212 = vrot.slane %v2210, 4
        %v2213 = vshll.u32 %v2143, 16
        %v2215 = vrot.slane %v2213, 5
        %v2216 = vor.u32 %v2212, %v2215
        %v2217 = vrot.slane %v2216, 4
        %v2219 = vshll.u32 %v2144, 16
        %v2221 = vrot.slane %v2219, 5
        %v2222 = vsel %vm259, %v2217, %v2221
        %v2223 = vshrl.u32 %v2144, 16
        %v2225 = vrot.slane %v2223, 4
        %v2226 = vor.u32 %v2225, %v2221
        %v2227 = vrot.slane %v2226, 4
        %v2229 = vshll.u32 %v2145, 16
        %v2231 = vrot.slane %v2229, 5
        %v2232 = vsel %vm259, %v2227, %v2231
        %v2234 = vshrl.u32 %v2146, 16
        %v2236 = vrot.slane %v2234, 4
        %v2237 = vshll.u32 %v2146, 16
        %v2239 = vrot.slane %v2237, 5
        %v2240 = vor.u32 %v2236, %v2239
        %v2241 = vrot.slane %v2240, 4
        %v2243 = vshll.u32 %v2147, 16
        %v2245 = vrot.slane %v2243, 5
        %v2246 = vsel %vm259, %v2241, %v2245
        %v2247 = vshrl.u32 %v2147, 16
        %v2249 = vrot.slane %v2247, 4
        %v2250 = vor.u32 %v2249, %v2245
        %v2251 = vrot.slane %v2250, 4
        %v2253 = vshll.u32 %v2148, 16
        %v2255 = vrot.slane %v2253, 5
        %v2256 = vsel %vm259, %v2251, %v2255
        %v2258 = vshrl.u32 %v2149, 16
        %v2260 = vrot.slane %v2258, 4
        %v2261 = vshll.u32 %v2149, 16
        %v2263 = vrot.slane %v2261, 5
        %v2264 = vor.u32 %v2260, %v2263
        %v2265 = vrot.slane %v2264, 4
        %v2267 = vshll.u32 %v2150, 16
        %v2269 = vrot.slane %v2267, 5
        %v2270 = vsel %vm259, %v2265, %v2269
        %v2271 = vshrl.u32 %v2150, 16
        %v2273 = vrot.slane %v2271, 4
        %v2274 = vor.u32 %v2273, %v2269
        %v2275 = vrot.slane %v2274, 4
        %v2277 = vshll.u32 %v2151, 16
        %v2279 = vrot.slane %v2277, 5
        %v2280 = vsel %vm259, %v2275, %v2279
        %v2282 = vshrl.u32 %v2152, 16
        %v2284 = vrot.slane %v2282, 4
        %v2285 = vshll.u32 %v2152, 16
        %v2287 = vrot.slane %v2285, 5
        %v2288 = vor.u32 %v2284, %v2287
        %v2289 = vrot.slane %v2288, 4
        %v2291 = vshll.u32 %v2153, 16
        %v2293 = vrot.slane %v2291, 5
        %v2294 = vsel %vm259, %v2289, %v2293
        %v2295 = vshrl.u32 %v2153, 16
        %v2297 = vrot.slane %v2295, 4
        %v2298 = vor.u32 %v2297, %v2293
        %v2299 = vrot.slane %v2298, 4
        %v2301 = vshll.u32 %v2154, 16
        %v2303 = vrot.slane %v2301, 5
        %v2304 = vsel %vm259, %v2299, %v2303
        %v2306 = vshrl.u32 %v2155, 16
        %v2308 = vrot.slane %v2306, 4
        %v2309 = vshll.u32 %v2155, 16
        %v2311 = vrot.slane %v2309, 5
        %v2312 = vor.u32 %v2308, %v2311
        %v2313 = vrot.slane %v2312, 4
        %v2315 = vshll.u32 %v2156, 16
        %v2317 = vrot.slane %v2315, 5
        %v2318 = vsel %vm259, %v2313, %v2317
        %v2319 = vshrl.u32 %v2156, 16
        %v2321 = vrot.slane %v2319, 4
        %v2322 = vor.u32 %v2321, %v2317
        %v2323 = vrot.slane %v2322, 4
        %v2325 = vshll.u32 %v2157, 16
        %v2327 = vrot.slane %v2325, 5
        %v2328 = vsel %vm259, %v2323, %v2327
        %v2330 = vshrl.u32 %v2158, 16
        %v2332 = vrot.slane %v2330, 4
        %v2333 = vshll.u32 %v2158, 16
        %v2335 = vrot.slane %v2333, 5
        %v2336 = vor.u32 %v2332, %v2335
        %v2337 = vrot.slane %v2336, 4
        %v2339 = vshll.u32 %v2159, 16
        %v2341 = vrot.slane %v2339, 5
        %v2342 = vsel %vm259, %v2337, %v2341
        %v2343 = vshrl.u32 %v2159, 16
        %v2345 = vrot.slane %v2343, 4
        %v2346 = vor.u32 %v2345, %v2341
        %v2347 = vrot.slane %v2346, 4
        %v2349 = vshll.u32 %v2160, 16
        %v2351 = vrot.slane %v2349, 5
        %v2352 = vsel %vm259, %v2347, %v2351
        %s2353 = scalar_lea.vmem %s219, 112
        %v2354 = vld [vmem:[%s2353] sm:$0xf]
        %v2355 = vld [vmem:[%s2353 + $0x4] sm:$0xf]
        %v2356 = vld [vmem:[%s2353 + $0x8] sm:$0xf]
        %v2357 = vld [vmem:[%s2353 + $0xc] sm:$0xf]
        %v2358 = vunpack.c.l.b16 %v2174
        %v2359 = vunpack.c.l.b16 %v2184
        %v2360 = vunpack.c.l.b16 %v2198
        %v2361 = vunpack.c.l.b16 %v2208
        %v2362 = vunpack.c.l.b16 %v2222
        %v2363 = vunpack.c.l.b16 %v2232
        %v2364 = vunpack.c.l.b16 %v2246
        %v2365 = vunpack.c.l.b16 %v2256
        %v2366 = vunpack.c.l.b16 %v2270
        %v2367 = vunpack.c.l.b16 %v2280
        %v2368 = vunpack.c.l.b16 %v2294
        %v2369 = vunpack.c.l.b16 %v2304
        %v2370 = vunpack.c.l.b16 %v2318
        %v2371 = vunpack.c.l.b16 %v2328
        %v2372 = vunpack.c.l.b16 %v2342
        %v2373 = vunpack.c.l.b16 %v2352
        %v2374 = vpack.c.b16 %v2359, %v2358
        %v2375 = vpack.c.b16 %v2361, %v2360
        %v2376 = vpack.c.b16 %v2363, %v2362
        %v2377 = vpack.c.b16 %v2365, %v2364
        %v2378 = vpack.c.b16 %v2367, %v2366
        %v2379 = vpack.c.b16 %v2369, %v2368
        %v2380 = vpack.c.b16 %v2371, %v2370
        %v2381 = vpack.c.b16 %v2373, %v2372
        %v2386 = vunpack.c.l.b16 %v2354
        %v2387 = vunpack.c.l.b16 %v2355
        %v2388 = vunpack.c.l.b16 %v2356
        %v2389 = vunpack.c.l.b16 %v2357
        %v2390 = vpack.c.b16 %v2387, %v2386
        %v2391 = vpack.c.b16 %v2389, %v2388
        %v2395 = vsel %vm493, %v2374, 0
        %v2398 = vsel %vm493, %v2375, 0
        %v2401 = vsel %vm493, %v2376, 0
        %v2404 = vsel %vm493, %v2377, 0
        %v2407 = vsel %vm493, %v2378, 0
        %v2410 = vsel %vm493, %v2379, 0
        %v2413 = vsel %vm493, %v2380, 0
        %v2416 = vsel %vm493, %v2381, 0
        %2418 = vmatprep.subr.bf16.mxu0 0
        %2419 = vmatpush1.bf16.msra.mxu0 0
        %2420 = vmatprep.subr.bf16.mxu0 0
        %2421 = vmatpush1.bf16.msra.mxu0 0
        %2422 = vmatprep.subr.bf16.mxu0 0
        %2423 = vmatpush1.bf16.msra.mxu0 0
        %2424 = vmatprep.subr.bf16.mxu0 0
        %2425 = vmatpush1.bf16.msra.mxu0 0
        %2426 = vmatprep.subr.bf16.mxu0 0
        %2427 = vmatpush1.bf16.msra.mxu0 0
        %2428 = vmatprep.subr.bf16.mxu0 0
        %2429 = vmatpush1.bf16.msra.mxu0 0
        %2430 = vmatprep.subr.bf16.mxu0 0
        %2431 = vmatpush1.bf16.msra.mxu0 %v2391
        %2432 = vmatprep.subr.bf16.mxu0 0
        %2433 = vmatpush1.bf16.msra.mxu0 %v2390
        %2434 = vmatprep.subr.bf16.mxu0 0
        %2435 = vmatpush2.bf16.msra.mxu0 0
        %2436 = vmatprep.subr.bf16.mxu0 0
        %2437 = vmatpush2.bf16.msra.mxu0 0
        %2438 = vmatprep.subr.bf16.mxu0 0
        %2439 = vmatpush2.bf16.msra.mxu0 0
        %2440 = vmatprep.subr.bf16.mxu0 0
        %2441 = vmatpush2.bf16.msra.mxu0 0
        %2442 = vmatprep.subr.bf16.mxu0 0
        %2443 = vmatpush2.bf16.msra.mxu0 0
        %2444 = vmatprep.subr.bf16.mxu0 0
        %2445 = vmatpush2.bf16.msra.mxu0 0
        %2446 = vmatprep.subr.bf16.mxu0 0
        %2447 = vmatpush2.bf16.msra.mxu0 0
        %2448 = vmatprep.subr.bf16.mxu0 0
        %2449 = vmatpush2.bf16.msra.mxu0 0
        %2450 = vmatprep.mubr.bf16.mxu0 0
        %2451 = vmatmul.mubr.bf16.gmra.mxu0 %v2395
        %v2452 = vpop.f32.mrf.mxu0
        %v2453 = vadd.f32 0.0, %v2452
        %v2454 = vpop.f32.mrf.mxu0
        %v2455 = vpop.f32.mrf.mxu0
        %v2456 = vadd.f32 0.0, %v2455
        %v2457 = vpop.f32.mrf.mxu0
        %2458 = vmatprep.mubr.bf16.mxu0 0
        %2459 = vmatmul.mubr.bf16.gmra.mxu0 %v2398
        %v2460 = vpop.f32.mrf.mxu0
        %v2461 = vadd.f32 0.0, %v2460
        %v2462 = vpop.f32.mrf.mxu0
        %v2463 = vpop.f32.mrf.mxu0
        %v2464 = vadd.f32 0.0, %v2463
        %v2465 = vpop.f32.mrf.mxu0
        %2466 = vmatprep.mubr.bf16.mxu0 0
        %2467 = vmatmul.mubr.bf16.gmra.mxu0 %v2401
        %v2468 = vpop.f32.mrf.mxu0
        %v2469 = vadd.f32 0.0, %v2468
        %v2470 = vpop.f32.mrf.mxu0
        %v2471 = vpop.f32.mrf.mxu0
        %v2472 = vadd.f32 0.0, %v2471
        %v2473 = vpop.f32.mrf.mxu0
        %2474 = vmatprep.mubr.bf16.mxu0 0
        %2475 = vmatmul.mubr.bf16.gmra.mxu0 %v2404
        %v2476 = vpop.f32.mrf.mxu0
        %v2477 = vadd.f32 0.0, %v2476
        %v2478 = vpop.f32.mrf.mxu0
        %v2479 = vpop.f32.mrf.mxu0
        %v2480 = vadd.f32 0.0, %v2479
        %v2481 = vpop.f32.mrf.mxu0
        %2482 = vmatprep.mubr.bf16.mxu0 0
        %2483 = vmatmul.mubr.bf16.gmra.mxu0 %v2407
        %v2484 = vpop.f32.mrf.mxu0
        %v2485 = vadd.f32 0.0, %v2484
        %v2486 = vpop.f32.mrf.mxu0
        %v2487 = vpop.f32.mrf.mxu0
        %v2488 = vadd.f32 0.0, %v2487
        %v2489 = vpop.f32.mrf.mxu0
        %2490 = vmatprep.mubr.bf16.mxu0 0
        %2491 = vmatmul.mubr.bf16.gmra.mxu0 %v2410
        %v2492 = vpop.f32.mrf.mxu0
        %v2493 = vadd.f32 0.0, %v2492
        %v2494 = vpop.f32.mrf.mxu0
        %v2495 = vpop.f32.mrf.mxu0
        %v2496 = vadd.f32 0.0, %v2495
        %v2497 = vpop.f32.mrf.mxu0
        %2498 = vmatprep.mubr.bf16.mxu0 0
        %2499 = vmatmul.mubr.bf16.gmra.mxu0 %v2413
        %v2500 = vpop.f32.mrf.mxu0
        %v2501 = vadd.f32 0.0, %v2500
        %v2502 = vpop.f32.mrf.mxu0
        %v2503 = vpop.f32.mrf.mxu0
        %v2504 = vadd.f32 0.0, %v2503
        %v2505 = vpop.f32.mrf.mxu0
        %2506 = vmatprep.mubr.bf16.mxu0 0
        %2507 = vmatmul.mubr.bf16.gmra.mxu0 %v2416
        %v2508 = vpop.f32.mrf.mxu0
        %v2509 = vadd.f32 0.0, %v2508
        %v2510 = vpop.f32.mrf.mxu0
        %v2511 = vpop.f32.mrf.mxu0
        %v2512 = vadd.f32 0.0, %v2511
        %v2513 = vpop.f32.mrf.mxu0
        %2514 = vdwg.mxu0
        %v2515 = vadd.f32 %v2121, %v2453
        %v2516 = vadd.f32 %v2122, %v2456
        %v2517 = vadd.f32 %v2123, %v2461
        %v2518 = vadd.f32 %v2124, %v2464
        %v2519 = vadd.f32 %v2125, %v2469
        %v2520 = vadd.f32 %v2126, %v2472
        %v2521 = vadd.f32 %v2127, %v2477
        %v2522 = vadd.f32 %v2128, %v2480
        %v2523 = vadd.f32 %v2129, %v2485
        %v2524 = vadd.f32 %v2130, %v2488
        %v2525 = vadd.f32 %v2131, %v2493
        %v2526 = vadd.f32 %v2132, %v2496
        %v2527 = vadd.f32 %v2133, %v2501
        %v2528 = vadd.f32 %v2134, %v2504
        %v2529 = vadd.f32 %v2135, %v2509
        %v2530 = vadd.f32 %v2136, %v2512
        %v2531 = vld [vmem:[%s1926] sm:$0xe]
        %v2532 = vld [vmem:[%s1926 + $0xc] sm:$0xe]
        %v2533 = vld [vmem:[%s1926 + $0x18] sm:$0xe]
        %v2534 = vld [vmem:[%s1926 + $0x24] sm:$0xe]
        %v2535 = vld [vmem:[%s1926 + $0x30] sm:$0xe]
        %v2536 = vld [vmem:[%s1926 + $0x3c] sm:$0xe]
        %v2537 = vld [vmem:[%s1926 + $0x48] sm:$0xe]
        %v2538 = vld [vmem:[%s1926 + $0x54] sm:$0xe]
        %v2563 = vrot.slane %v2531, 5
        %v2564 = vrot.slane %v2563, 4
        %v2565 = vrot.slane %v2138, 5
        %v2566 = vsel %vm814, %v2564, %v2565
        %v2567 = vrot.slane %v2565, 4
        %v2568 = vrot.slane %v2139, 5
        %v2569 = vsel %vm814, %v2567, %v2568
        %v2570 = vrot.slane %v2532, 5
        %v2571 = vrot.slane %v2570, 4
        %v2572 = vrot.slane %v2141, 5
        %v2573 = vsel %vm814, %v2571, %v2572
        %v2574 = vrot.slane %v2572, 4
        %v2575 = vrot.slane %v2142, 5
        %v2576 = vsel %vm814, %v2574, %v2575
        %v2577 = vrot.slane %v2533, 5
        %v2578 = vrot.slane %v2577, 4
        %v2579 = vrot.slane %v2144, 5
        %v2580 = vsel %vm814, %v2578, %v2579
        %v2581 = vrot.slane %v2579, 4
        %v2582 = vrot.slane %v2145, 5
        %v2583 = vsel %vm814, %v2581, %v2582
        %v2584 = vrot.slane %v2534, 5
        %v2585 = vrot.slane %v2584, 4
        %v2586 = vrot.slane %v2147, 5
        %v2587 = vsel %vm814, %v2585, %v2586
        %v2588 = vrot.slane %v2586, 4
        %v2589 = vrot.slane %v2148, 5
        %v2590 = vsel %vm814, %v2588, %v2589
        %v2591 = vrot.slane %v2535, 5
        %v2592 = vrot.slane %v2591, 4
        %v2593 = vrot.slane %v2150, 5
        %v2594 = vsel %vm814, %v2592, %v2593
        %v2595 = vrot.slane %v2593, 4
        %v2596 = vrot.slane %v2151, 5
        %v2597 = vsel %vm814, %v2595, %v2596
        %v2598 = vrot.slane %v2536, 5
        %v2599 = vrot.slane %v2598, 4
        %v2600 = vrot.slane %v2153, 5
        %v2601 = vsel %vm814, %v2599, %v2600
        %v2602 = vrot.slane %v2600, 4
        %v2603 = vrot.slane %v2154, 5
        %v2604 = vsel %vm814, %v2602, %v2603
        %v2605 = vrot.slane %v2537, 5
        %v2606 = vrot.slane %v2605, 4
        %v2607 = vrot.slane %v2156, 5
        %v2608 = vsel %vm814, %v2606, %v2607
        %v2609 = vrot.slane %v2607, 4
        %v2610 = vrot.slane %v2157, 5
        %v2611 = vsel %vm814, %v2609, %v2610
        %v2612 = vrot.slane %v2538, 5
        %v2613 = vrot.slane %v2612, 4
        %v2614 = vrot.slane %v2159, 5
        %v2615 = vsel %vm814, %v2613, %v2614
        %v2616 = vrot.slane %v2614, 4
        %v2617 = vrot.slane %v2160, 5
        %v2618 = vsel %vm814, %v2616, %v2617
        %s2619 = scalar_lea.vmem %s219, 128
        %v2620 = vld [vmem:[%s2619] sm:$0xf]
        %v2621 = vld [vmem:[%s2619 + $0x4] sm:$0xf]
        %v2622 = vld [vmem:[%s2619 + $0x8] sm:$0xf]
        %v2623 = vld [vmem:[%s2619 + $0xc] sm:$0xf]
        %v2624 = vunpack.c.l.b16 %v2566
        %v2625 = vunpack.c.l.b16 %v2569
        %v2626 = vunpack.c.l.b16 %v2573
        %v2627 = vunpack.c.l.b16 %v2576
        %v2628 = vunpack.c.l.b16 %v2580
        %v2629 = vunpack.c.l.b16 %v2583
        %v2630 = vunpack.c.l.b16 %v2587
        %v2631 = vunpack.c.l.b16 %v2590
        %v2632 = vunpack.c.l.b16 %v2594
        %v2633 = vunpack.c.l.b16 %v2597
        %v2634 = vunpack.c.l.b16 %v2601
        %v2635 = vunpack.c.l.b16 %v2604
        %v2636 = vunpack.c.l.b16 %v2608
        %v2637 = vunpack.c.l.b16 %v2611
        %v2638 = vunpack.c.l.b16 %v2615
        %v2639 = vunpack.c.l.b16 %v2618
        %v2640 = vpack.c.b16 %v2625, %v2624
        %v2641 = vpack.c.b16 %v2627, %v2626
        %v2642 = vpack.c.b16 %v2629, %v2628
        %v2643 = vpack.c.b16 %v2631, %v2630
        %v2644 = vpack.c.b16 %v2633, %v2632
        %v2645 = vpack.c.b16 %v2635, %v2634
        %v2646 = vpack.c.b16 %v2637, %v2636
        %v2647 = vpack.c.b16 %v2639, %v2638
        %v2652 = vunpack.c.l.b16 %v2620
        %v2653 = vunpack.c.l.b16 %v2621
        %v2654 = vunpack.c.l.b16 %v2622
        %v2655 = vunpack.c.l.b16 %v2623
        %v2656 = vpack.c.b16 %v2653, %v2652
        %v2657 = vpack.c.b16 %v2655, %v2654
        %v2661 = vsel %vm493, %v2640, 0
        %v2664 = vsel %vm493, %v2641, 0
        %v2667 = vsel %vm493, %v2642, 0
        %v2670 = vsel %vm493, %v2643, 0
        %v2673 = vsel %vm493, %v2644, 0
        %v2676 = vsel %vm493, %v2645, 0
        %v2679 = vsel %vm493, %v2646, 0
        %v2682 = vsel %vm493, %v2647, 0
        %2684 = vmatprep.subr.bf16.mxu0 0
        %2685 = vmatpush1.bf16.msra.mxu0 0
        %2686 = vmatprep.subr.bf16.mxu0 0
        %2687 = vmatpush1.bf16.msra.mxu0 0
        %2688 = vmatprep.subr.bf16.mxu0 0
        %2689 = vmatpush1.bf16.msra.mxu0 0
        %2690 = vmatprep.subr.bf16.mxu0 0
        %2691 = vmatpush1.bf16.msra.mxu0 0
        %2692 = vmatprep.subr.bf16.mxu0 0
        %2693 = vmatpush1.bf16.msra.mxu0 0
        %2694 = vmatprep.subr.bf16.mxu0 0
        %2695 = vmatpush1.bf16.msra.mxu0 0
        %2696 = vmatprep.subr.bf16.mxu0 0
        %2697 = vmatpush1.bf16.msra.mxu0 %v2657
        %2698 = vmatprep.subr.bf16.mxu0 0
        %2699 = vmatpush1.bf16.msra.mxu0 %v2656
        %2700 = vmatprep.subr.bf16.mxu0 0
        %2701 = vmatpush2.bf16.msra.mxu0 0
        %2702 = vmatprep.subr.bf16.mxu0 0
        %2703 = vmatpush2.bf16.msra.mxu0 0
        %2704 = vmatprep.subr.bf16.mxu0 0
        %2705 = vmatpush2.bf16.msra.mxu0 0
        %2706 = vmatprep.subr.bf16.mxu0 0
        %2707 = vmatpush2.bf16.msra.mxu0 0
        %2708 = vmatprep.subr.bf16.mxu0 0
        %2709 = vmatpush2.bf16.msra.mxu0 0
        %2710 = vmatprep.subr.bf16.mxu0 0
        %2711 = vmatpush2.bf16.msra.mxu0 0
        %2712 = vmatprep.subr.bf16.mxu0 0
        %2713 = vmatpush2.bf16.msra.mxu0 0
        %2714 = vmatprep.subr.bf16.mxu0 0
        %2715 = vmatpush2.bf16.msra.mxu0 0
        %2716 = vmatprep.mubr.bf16.mxu0 0
        %2717 = vmatmul.mubr.bf16.gmra.mxu0 %v2661
        %v2718 = vpop.f32.mrf.mxu0
        %v2719 = vadd.f32 0.0, %v2718
        %v2720 = vpop.f32.mrf.mxu0
        %v2721 = vpop.f32.mrf.mxu0
        %v2722 = vadd.f32 0.0, %v2721
        %v2723 = vpop.f32.mrf.mxu0
        %2724 = vmatprep.mubr.bf16.mxu0 0
        %2725 = vmatmul.mubr.bf16.gmra.mxu0 %v2664
        %v2726 = vpop.f32.mrf.mxu0
        %v2727 = vadd.f32 0.0, %v2726
        %v2728 = vpop.f32.mrf.mxu0
        %v2729 = vpop.f32.mrf.mxu0
        %v2730 = vadd.f32 0.0, %v2729
        %v2731 = vpop.f32.mrf.mxu0
        %2732 = vmatprep.mubr.bf16.mxu0 0
        %2733 = vmatmul.mubr.bf16.gmra.mxu0 %v2667
        %v2734 = vpop.f32.mrf.mxu0
        %v2735 = vadd.f32 0.0, %v2734
        %v2736 = vpop.f32.mrf.mxu0
        %v2737 = vpop.f32.mrf.mxu0
        %v2738 = vadd.f32 0.0, %v2737
        %v2739 = vpop.f32.mrf.mxu0
        %2740 = vmatprep.mubr.bf16.mxu0 0
        %2741 = vmatmul.mubr.bf16.gmra.mxu0 %v2670
        %v2742 = vpop.f32.mrf.mxu0
        %v2743 = vadd.f32 0.0, %v2742
        %v2744 = vpop.f32.mrf.mxu0
        %v2745 = vpop.f32.mrf.mxu0
        %v2746 = vadd.f32 0.0, %v2745
        %v2747 = vpop.f32.mrf.mxu0
        %2748 = vmatprep.mubr.bf16.mxu0 0
        %2749 = vmatmul.mubr.bf16.gmra.mxu0 %v2673
        %v2750 = vpop.f32.mrf.mxu0
        %v2751 = vadd.f32 0.0, %v2750
        %v2752 = vpop.f32.mrf.mxu0
        %v2753 = vpop.f32.mrf.mxu0
        %v2754 = vadd.f32 0.0, %v2753
        %v2755 = vpop.f32.mrf.mxu0
        %2756 = vmatprep.mubr.bf16.mxu0 0
        %2757 = vmatmul.mubr.bf16.gmra.mxu0 %v2676
        %v2758 = vpop.f32.mrf.mxu0
        %v2759 = vadd.f32 0.0, %v2758
        %v2760 = vpop.f32.mrf.mxu0
        %v2761 = vpop.f32.mrf.mxu0
        %v2762 = vadd.f32 0.0, %v2761
        %v2763 = vpop.f32.mrf.mxu0
        %2764 = vmatprep.mubr.bf16.mxu0 0
        %2765 = vmatmul.mubr.bf16.gmra.mxu0 %v2679
        %v2766 = vpop.f32.mrf.mxu0
        %v2767 = vadd.f32 0.0, %v2766
        %v2768 = vpop.f32.mrf.mxu0
        %v2769 = vpop.f32.mrf.mxu0
        %v2770 = vadd.f32 0.0, %v2769
        %v2771 = vpop.f32.mrf.mxu0
        %2772 = vmatprep.mubr.bf16.mxu0 0
        %2773 = vmatmul.mubr.bf16.gmra.mxu0 %v2682
        %v2774 = vpop.f32.mrf.mxu0
        %v2775 = vadd.f32 0.0, %v2774
        %v2776 = vpop.f32.mrf.mxu0
        %v2777 = vpop.f32.mrf.mxu0
        %v2778 = vadd.f32 0.0, %v2777
        %v2779 = vpop.f32.mrf.mxu0
        %2780 = vdwg.mxu0
        %v2781 = vadd.f32 %v2515, %v2719
        %v2782 = vadd.f32 %v2516, %v2722
        %v2783 = vadd.f32 %v2517, %v2727
        %v2784 = vadd.f32 %v2518, %v2730
        %v2785 = vadd.f32 %v2519, %v2735
        %v2786 = vadd.f32 %v2520, %v2738
        %v2787 = vadd.f32 %v2521, %v2743
        %v2788 = vadd.f32 %v2522, %v2746
        %v2789 = vadd.f32 %v2523, %v2751
        %v2790 = vadd.f32 %v2524, %v2754
        %v2791 = vadd.f32 %v2525, %v2759
        %v2792 = vadd.f32 %v2526, %v2762
        %v2793 = vadd.f32 %v2527, %v2767
        %v2794 = vadd.f32 %v2528, %v2770
        %v2795 = vadd.f32 %v2529, %v2775
        %v2796 = vadd.f32 %v2530, %v2778
        %v2797 = vld [vmem:[%s222] sm:$0x1]
        %v2799 = vlaneseq
        %v2800 = vshrl.u32 %v2799, 7
        %v2801 = vsub.s32 0, %v2800
        %v2802 = vrot.slane %v2797, %v2801
        %v2804 = vadd.f32 %v2781, %v2802
        %v2805 = vadd.f32 %v2782, %v2802
        %v2806 = vadd.f32 %v2783, %v2802
        %v2807 = vadd.f32 %v2784, %v2802
        %v2808 = vadd.f32 %v2785, %v2802
        %v2809 = vadd.f32 %v2786, %v2802
        %v2810 = vadd.f32 %v2787, %v2802
        %v2811 = vadd.f32 %v2788, %v2802
        %v2812 = vadd.f32 %v2789, %v2802
        %v2813 = vadd.f32 %v2790, %v2802
        %v2814 = vadd.f32 %v2791, %v2802
        %v2815 = vadd.f32 %v2792, %v2802
        %v2816 = vadd.f32 %v2793, %v2802
        %v2817 = vadd.f32 %v2794, %v2802
        %v2818 = vadd.f32 %v2795, %v2802
        %v2819 = vadd.f32 %v2796, %v2802
        %vm2820 = vcmp.ge.f32.partialorder %v2804, 0.0
        %vm2821 = vcmp.ge.f32.partialorder %v2805, 0.0
        %vm2822 = vcmp.ge.f32.partialorder %v2806, 0.0
        %vm2823 = vcmp.ge.f32.partialorder %v2807, 0.0
        %vm2824 = vcmp.ge.f32.partialorder %v2808, 0.0
        %vm2825 = vcmp.ge.f32.partialorder %v2809, 0.0
        %vm2826 = vcmp.ge.f32.partialorder %v2810, 0.0
        %vm2827 = vcmp.ge.f32.partialorder %v2811, 0.0
        %vm2828 = vcmp.ge.f32.partialorder %v2812, 0.0
        %vm2829 = vcmp.ge.f32.partialorder %v2813, 0.0
        %vm2830 = vcmp.ge.f32.partialorder %v2814, 0.0
        %vm2831 = vcmp.ge.f32.partialorder %v2815, 0.0
        %vm2832 = vcmp.ge.f32.partialorder %v2816, 0.0
        %vm2833 = vcmp.ge.f32.partialorder %v2817, 0.0
        %vm2834 = vcmp.ge.f32.partialorder %v2818, 0.0
        %vm2835 = vcmp.ge.f32.partialorder %v2819, 0.0
        %v2836 = vmul.f32 %v2804, 0.1
        %v2837 = vmul.f32 %v2805, 0.1
        %v2838 = vmul.f32 %v2806, 0.1
        %v2839 = vmul.f32 %v2807, 0.1
        %v2840 = vmul.f32 %v2808, 0.1
        %v2841 = vmul.f32 %v2809, 0.1
        %v2842 = vmul.f32 %v2810, 0.1
        %v2843 = vmul.f32 %v2811, 0.1
        %v2844 = vmul.f32 %v2812, 0.1
        %v2845 = vmul.f32 %v2813, 0.1
        %v2846 = vmul.f32 %v2814, 0.1
        %v2847 = vmul.f32 %v2815, 0.1
        %v2848 = vmul.f32 %v2816, 0.1
        %v2849 = vmul.f32 %v2817, 0.1
        %v2850 = vmul.f32 %v2818, 0.1
        %v2851 = vmul.f32 %v2819, 0.1
        %v2852 = vsel %vm2820, %v2804, %v2836
        %v2853 = vsel %vm2821, %v2805, %v2837
        %v2854 = vsel %vm2822, %v2806, %v2838
        %v2855 = vsel %vm2823, %v2807, %v2839
        %v2856 = vsel %vm2824, %v2808, %v2840
        %v2857 = vsel %vm2825, %v2809, %v2841
        %v2858 = vsel %vm2826, %v2810, %v2842
        %v2859 = vsel %vm2827, %v2811, %v2843
        %v2860 = vsel %vm2828, %v2812, %v2844
        %v2861 = vsel %vm2829, %v2813, %v2845
        %v2862 = vsel %vm2830, %v2814, %v2846
        %v2863 = vsel %vm2831, %v2815, %v2847
        %v2864 = vsel %vm2832, %v2816, %v2848
        %v2865 = vsel %vm2833, %v2817, %v2849
        %v2866 = vsel %vm2834, %v2818, %v2850
        %v2867 = vsel %vm2835, %v2819, %v2851
        %v2868 = vpack.c.bf16 %v2853, %v2852
        %v2869 = vpack.c.bf16 %v2855, %v2854
        %v2870 = vpack.c.bf16 %v2857, %v2856
        %v2871 = vpack.c.bf16 %v2859, %v2858
        %v2872 = vpack.c.bf16 %v2861, %v2860
        %v2873 = vpack.c.bf16 %v2863, %v2862
        %v2874 = vpack.c.bf16 %v2865, %v2864
        %v2875 = vpack.c.bf16 %v2867, %v2866
        %v2884 = vunpack.c.l.b16 %v2868
        %v2885 = vunpack.c.h.b16 %v2868
        %v2886 = vunpack.c.l.b16 %v2869
        %v2887 = vunpack.c.h.b16 %v2869
        %v2888 = vunpack.c.l.b16 %v2870
        %v2889 = vunpack.c.h.b16 %v2870
        %v2890 = vunpack.c.l.b16 %v2871
        %v2891 = vunpack.c.h.b16 %v2871
        %v2892 = vunpack.c.l.b16 %v2872
        %v2893 = vunpack.c.h.b16 %v2872
        %v2894 = vunpack.c.l.b16 %v2873
        %v2895 = vunpack.c.h.b16 %v2873
        %v2896 = vunpack.c.l.b16 %v2874
        %v2897 = vunpack.c.h.b16 %v2874
        %v2898 = vunpack.c.l.b16 %v2875
        %v2899 = vunpack.c.h.b16 %v2875
        %v2900 = vpack.c.b16 %v2884, %v2884
        %v2901 = vpack.c.b16 %v2885, %v2885
        %v2902 = vpack.c.b16 %v2886, %v2886
        %v2903 = vpack.c.b16 %v2887, %v2887
        %v2904 = vpack.c.b16 %v2888, %v2888
        %v2905 = vpack.c.b16 %v2889, %v2889
        %v2906 = vpack.c.b16 %v2890, %v2890
        %v2907 = vpack.c.b16 %v2891, %v2891
        %v2908 = vpack.c.b16 %v2892, %v2892
        %v2909 = vpack.c.b16 %v2893, %v2893
        %v2910 = vpack.c.b16 %v2894, %v2894
        %v2911 = vpack.c.b16 %v2895, %v2895
        %v2912 = vpack.c.b16 %v2896, %v2896
        %v2913 = vpack.c.b16 %v2897, %v2897
        %v2914 = vpack.c.b16 %v2898, %v2898
        %v2915 = vpack.c.b16 %v2899, %v2899
        %2932 = vst [vmem:[%s210] sm:$0xf] %v2900
        %2933 = vst [vmem:[%s210 + $0x4] sm:$0xf] %v2901
        %2934 = vst [vmem:[%s210 + $0x8] sm:$0xf] %v2902
        %2935 = vst [vmem:[%s210 + $0xc] sm:$0xf] %v2903
        %2936 = vst [vmem:[%s210 + $0x10] sm:$0xf] %v2904
        %2937 = vst [vmem:[%s210 + $0x14] sm:$0xf] %v2905
        %2938 = vst [vmem:[%s210 + $0x18] sm:$0xf] %v2906
        %2939 = vst [vmem:[%s210 + $0x1c] sm:$0xf] %v2907
        %2940 = vst [vmem:[%s210 + $0x20] sm:$0xf] %v2908
        %2941 = vst [vmem:[%s210 + $0x24] sm:$0xf] %v2909
        %2942 = vst [vmem:[%s210 + $0x28] sm:$0xf] %v2910
        %2943 = vst [vmem:[%s210 + $0x2c] sm:$0xf] %v2911
        %2944 = vst [vmem:[%s210 + $0x30] sm:$0xf] %v2912
        %2945 = vst [vmem:[%s210 + $0x34] sm:$0xf] %v2913
        %2946 = vst [vmem:[%s210 + $0x38] sm:$0xf] %v2914
        %2947 = vst [vmem:[%s210 + $0x3c] sm:$0xf] %v2915
        %s2948 = sand.u32 %s126, 1
        %s2949 = scalar_lea.sflag [#allocation3], %s2948
        %s2950 = sand.u32 %s126, 1
        %s2951 = smul.addr %s2950, 64
        %s2952 = scalar_lea.vmem [#allocation2], %s2951
        // Predicated region
        $region33: #{cnn_block_forward.1} parent=31 // pred_check
          %p2953 = pneg %p136
        $region34: #{cnn_block_forward.1} parent=31 // pred_check_branch
          %2955 = sbr.rel (%p2953) target = $region36
        $region35: #{cnn_block_forward.1} parent=31 // pred_region
          %s2956 = smul.u32 8, %s24
          %s2958 = ssub.s32 1024, 1024
          %2959 = vsyncadd %s2949, %s2958
          %s2960 = smul.addr %s2956, 2
          %s2961 = sadd.s32 %s23, %s2960
          %s2962 = smul.addr %s22, 32
          %s2963 = sadd.s32 %s2961, %s2962
          %s2964 = smul.addr %s2963, 64
          %s2965 = scalar_lea.hbm %s3, %s2964
          %s2966 = sshll.u32 %s2952, 4
          %s2967 = int_to_ptr.vmem [resolvable:$true] %s2966
          %2972 = dma.vmem_to_hbm [thread:$0]  %s2967, 1024, %s2965, %s2949, 64, 64, 4
        $region36: #{cnn_block_forward.1} parent=31 // pred_fallthru
          _
      $region32: #{cnn_block_forward.1} parent=5 // pred_fallthru
        _
      %p2973 = scmp.le.s32.totalorder 2, %s12
      // Predicated region
      $region37: #{cnn_block_forward.1} parent=5 // pred_check
        %p2974 = pneg %p2973
      $region38: #{cnn_block_forward.1} parent=5 // pred_check_branch
        %2976 = sbr.rel (%p2974) target = $region40
      $region39: #{cnn_block_forward.1} parent=5 // pred_region
        %s2977 = ssub.s32 %s12, 2
        // Predicated region
        $region41: #{cnn_block_forward.1} parent=39 // pred_check
          %p2978 = pneg %p142
        $region42: #{cnn_block_forward.1} parent=39 // pred_check_branch
          %2980 = sbr.rel (%p2978) target = $region44
        $region43: #{cnn_block_forward.1} parent=39 // pred_region
          %s2981 = sand.u32 %s127, 1
          %s2982 = scalar_lea.sflag [#allocation3], %s2981
          %s2983 = sand.u32 %s127, 1
          %s2984 = smul.addr %s2983, 64
          %s2985 = scalar_lea.vmem [#allocation2], %s2984
          %2986 = dma.done %s2982, 1024
        $region44: #{cnn_block_forward.1} parent=39 // pred_fallthru
          _
      $region40: #{cnn_block_forward.1} parent=5 // pred_fallthru
        _
    $region6: #{cnn_block_forward.1} parent=1 // loop_footer
      %s16 = sadd.s32 1, %s12
    $region7: #{cnn_block_forward.1} parent=1 // loop_footer_branch
      %11 = sbr.rel target = $region3
    $region8: #{cnn_block_forward.1} parent=1 // loop_exit
      _
    %2987 = vsyncpa [#allocation3], 1
    %s2988 = scalar_lea.sflag [#allocation3], 1
    %2989 = vsyncpa %s2988, 1

</llo_original>
